<compile_context>
chip_gen: v7x
topology: tpu7x:2x2x1
jax: 0.10.0
libtpu: 0.0.40
codegen_flags: <defaults>
</compile_context>

<pallas_src>
import functools
import math

import numpy as np
import jax
import jax.numpy as jnp
from jax.experimental import pallas as pl
from jax.experimental.pallas import tpu as pltpu

# -------------------- small, forward-consistent configuration ---------------
B = 8                        # batch size (8 -> full f32 sublane tile)
L = 64                       # n_points of the reflectivity curve
DIM_OUT = 8                  # predicted parameters
DIM_BOUNDS = 2 * DIM_OUT     # prior bounds (min/max per parameter)
CONV_CHANNELS = (8, 16, 32)  # ConvEncoder hidden channels
KSIZE, STRIDE, PAD = 3, 2, 1
DIM_EMB = 64                 # dim_embedding
LAYER_WIDTH = 128            # MLP layer_width
NUM_BLOCKS = 2               # MLP num_blocks
REPEATS = 2                  # repeats_per_block
TANH_OUTPUT = False
EPS = 1e-5                   # BatchNorm eps

_VMEM_SPEC = pl.BlockSpec(memory_space=pltpu.MemorySpace.VMEM)


def _gelu(x):
    # TODO(synk): PyTorch nn.GELU defaults to the erf-exact form; the tanh
    # approximation is used here for robust Mosaic lowering.
    return jax.nn.gelu(x, approximate=True)


# ------------------------------ fused Pallas kernel --------------------------
def _fused_kernel(x_ref, bnd_ref,
                  w1_ref, b1_ref, w2_ref, b2_ref, w3_ref, b3_ref,
                  wpf_ref, bpf_ref,
                  w0e_ref, w0b_ref, b0_ref,
                  wb_ref, bb_ref, g_ref, be_ref,
                  wo_ref, bo_ref, o_ref):
    """Whole NetworkWithPriors forward; all intermediates live in VMEM/vregs."""
    # --- ConvEncoder: each Conv1d pre-folded into a dense matrix over [B, C*L] ---
    h = _gelu(jnp.dot(x_ref[...], w1_ref[...],
                      preferred_element_type=jnp.float32) + b1_ref[...])
    h = _gelu(jnp.dot(h, w2_ref[...],
                      preferred_element_type=jnp.float32) + b2_ref[...])
    h = _gelu(jnp.dot(h, w3_ref[...],
                      preferred_element_type=jnp.float32) + b3_ref[...])
    # AdaptiveAvgPool1d(1) + flatten + Linear, fused into one matrix.
    emb = jnp.dot(h, wpf_ref[...], preferred_element_type=jnp.float32) + bpf_ref[...]

    # --- conditioning='concat' realized as a split first layer (no concat op) ---
    h = (jnp.dot(emb, w0e_ref[...], preferred_element_type=jnp.float32)
         + jnp.dot(bnd_ref[...], w0b_ref[...], preferred_element_type=jnp.float32)
         + b0_ref[...])

    # --- ResidualMLP blocks: [BatchNorm1d, GELU, Linear] x REPEATS + skip ---
    for blk in range(NUM_BLOCKS):
        y = h
        for r in range(REPEATS):
            i = blk * REPEATS + r
            # TODO(synk): BatchNorm1d uses per-call batch statistics (training-mode,
            # biased variance); an eval()-mode model would use running stats.
            mu = jnp.mean(y, axis=0, keepdims=True)
            var = jnp.mean((y - mu) ** 2, axis=0, keepdims=True)
            y = (y - mu) * jax.lax.rsqrt(var + EPS)
            y = y * g_ref[i] + be_ref[i]
            y = _gelu(y)
            y = jnp.dot(y, wb_ref[i], preferred_element_type=jnp.float32) + bb_ref[i]
            # dropout_rate = 0.0 -> no-op
        h = h + y                                   # residual skip connection

    out = jnp.dot(h, wo_ref[...], preferred_element_type=jnp.float32) + bo_ref[...]
    if TANH_OUTPUT:
        out = jnp.tanh(out)
    o_ref[...] = out.astype(o_ref.dtype)


# ------------------------ init-time parameter preparation --------------------
def _conv1d_as_dense(w, b, l_in, stride, pad):
    """Fold Conv1d(w[C_out,C_in,K], bias b, stride, pad) into a dense matrix acting
    on the channel-major flattened activation:  [C_in*L_in] -> [C_out*L_out]."""
    w = np.asarray(w, np.float32)
    b = np.asarray(b, np.float32).reshape(-1)
    c_out, c_in, k = w.shape
    l_out = (l_in + 2 * pad - k) // stride + 1
    mat = np.zeros((c_in, l_in, c_out, l_out), np.float32)
    for kk in range(k):
        for lo in range(l_out):
            li = stride * lo + kk - pad
            if 0 <= li < l_in:
                mat[:, li, :, lo] = w[:, :, kk].T
    mat = mat.reshape(c_in * l_in, c_out * l_out)
    bias = np.repeat(b, l_out)[None, :].astype(np.float32)   # [1, C_out*L_out]
    return jnp.asarray(mat), jnp.asarray(bias), l_out


def init_params(key):
    keys = iter(jax.random.split(key, 16))

    # ConvEncoder raw weights (PyTorch Conv1d layout [C_out, C_in, K]), zero bias.
    conv_raw = []
    c_in = 1
    for c_out in CONV_CHANNELS:
        w = jax.random.normal(next(keys), (c_out, c_in, KSIZE), jnp.float32)
        w = w * (1.0 / math.sqrt(c_in * KSIZE))
        conv_raw.append((np.asarray(w), np.zeros((c_out,), np.float32)))
        c_in = c_out
    fc_w = np.asarray(
        jax.random.normal(next(keys), (c_in, DIM_EMB), jnp.float32) / math.sqrt(c_in))
    fc_b = np.zeros((DIM_EMB,), np.float32)

    params = {}

    # Fold each Conv1d into an equivalent dense matrix (done once, on the host).
    dense = []
    l_cur = L
    for w, b in conv_raw:
        mat, bias, l_cur = _conv1d_as_dense(w, b, l_cur, STRIDE, PAD)
        dense.append((mat, bias))
    params["conv_dense"] = dense

    # AdaptiveAvgPool1d(1) + flatten + Linear fused into one [C_last*L_last, DIM_EMB] matrix.
    c_last, l_last = CONV_CHANNELS[-1], l_cur
    pool = np.zeros((c_last * l_last, c_last), np.float32)
    for c in range(c_last):
        pool[c * l_last:(c + 1) * l_last, c] = 1.0 / l_last
    params["wpf"] = jnp.asarray(pool @ fc_w)
    params["bpf"] = jnp.asarray(fc_b[None, :])

    # ResidualMLP (conditioning='concat' -> first layer takes embedding ++ bounds).
    dim_mlp_in = DIM_EMB + DIM_BOUNDS
    w0 = jax.random.normal(next(keys), (dim_mlp_in, LAYER_WIDTH), jnp.float32)
    w0 = w0 / math.sqrt(dim_mlp_in)
    params["w0_emb"] = w0[:DIM_EMB]            # [DIM_EMB, LAYER_WIDTH]
    params["w0_bnd"] = w0[DIM_EMB:]            # [DIM_BOUNDS, LAYER_WIDTH]
    params["b0"] = jnp.zeros((1, LAYER_WIDTH), jnp.float32)

    nrep = NUM_BLOCKS * REPEATS
    params["wb"] = (jax.random.normal(next(keys), (nrep, LAYER_WIDTH, LAYER_WIDTH),
                                      jnp.float32) / math.sqrt(LAYER_WIDTH))
    params["bb"] = 0.01 * jax.random.normal(next(keys), (nrep, 1, LAYER_WIDTH), jnp.float32)
    params["gamma"] = 1.0 + 0.1 * jax.random.normal(next(keys), (nrep, 1, LAYER_WIDTH), jnp.float32)
    params["beta"] = 0.1 * jax.random.normal(next(keys), (nrep, 1, LAYER_WIDTH), jnp.float32)

    params["wo"] = (jax.random.normal(next(keys), (LAYER_WIDTH, DIM_OUT), jnp.float32)
                    / math.sqrt(LAYER_WIDTH))
    params["bo"] = jnp.zeros((1, DIM_OUT), jnp.float32)
    return params


# ---------------------------------- wrapper -----------------------------------
def network_with_priors_forward(params, curves, bounds):
    """curves: [B, n_points] or [B, C, n_points]; bounds: [B, 2*dim_out]."""
    if curves.ndim == 2:
        curves = curves[:, None, :]               # unsqueeze channel dim
    # q_values / conditioning_params are None in this configuration.
    bsz = curves.shape[0]
    x = curves.reshape(bsz, -1).astype(jnp.float32)   # channel-major flatten [B, C*L]

    (w1, b1), (w2, b2), (w3, b3) = params["conv_dense"]

    out = pl.pallas_call(
        _fused_kernel,
        out_shape=jax.ShapeDtypeStruct((bsz, DIM_OUT), jnp.float32),
        in_specs=[_VMEM_SPEC] * 19,
        out_specs=_VMEM_SPEC,
    )(x, bounds.astype(jnp.float32),
      w1, b1, w2, b2, w3, b3,
      params["wpf"], params["bpf"],
      params["w0_emb"], params["w0_bnd"], params["b0"],
      params["wb"], params["bb"], params["gamma"], params["beta"],
      params["wo"], params["bo"])
    return out


if __name__ == "__main__":
    key = jax.random.PRNGKey(0)
    pkey, ckey, bkey = jax.random.split(key, 3)
    params = init_params(pkey)

    curves = jax.random.normal(ckey, (B, L), jnp.float32)           # [batch, n_points]
    bounds = jax.random.normal(bkey, (B, DIM_BOUNDS), jnp.float32)  # [batch, 2*dim_out]

    fwd = jax.jit(functools.partial(network_with_priors_forward, params))
    out = jax.block_until_ready(fwd(curves, bounds))
    assert out.shape == (B, DIM_OUT), out.shape
    assert bool(jnp.all(jnp.isfinite(out)))
    print("KERNEL_OK")
</pallas_src>

<mosaic_0001>
module attributes {stable_mosaic.version = 11 : i64} {
  func.func @_fused_kernel(%arg0: memref<8x64xf32, #tpu.memory_space<vmem>>, %arg1: memref<8x16xf32, #tpu.memory_space<vmem>>, %arg2: memref<64x256xf32, #tpu.memory_space<vmem>>, %arg3: memref<1x256xf32, #tpu.memory_space<vmem>>, %arg4: memref<256x256xf32, #tpu.memory_space<vmem>>, %arg5: memref<1x256xf32, #tpu.memory_space<vmem>>, %arg6: memref<256x256xf32, #tpu.memory_space<vmem>>, %arg7: memref<1x256xf32, #tpu.memory_space<vmem>>, %arg8: memref<256x64xf32, #tpu.memory_space<vmem>>, %arg9: memref<1x64xf32, #tpu.memory_space<vmem>>, %arg10: memref<64x128xf32, #tpu.memory_space<vmem>>, %arg11: memref<16x128xf32, #tpu.memory_space<vmem>>, %arg12: memref<1x128xf32, #tpu.memory_space<vmem>>, %arg13: memref<4x128x128xf32, #tpu.memory_space<vmem>>, %arg14: memref<4x1x128xf32, #tpu.memory_space<vmem>>, %arg15: memref<4x1x128xf32, #tpu.memory_space<vmem>>, %arg16: memref<4x1x128xf32, #tpu.memory_space<vmem>>, %arg17: memref<128x8xf32, #tpu.memory_space<vmem>>, %arg18: memref<1x8xf32, #tpu.memory_space<vmem>>, %arg19: memref<8x8xf32, #tpu.memory_space<vmem>>) attributes {dimension_semantics = [], scalar_prefetch = 0 : i64, scratch_operands = 0 : i64, tpu.core_type = #tpu.core_type<tc>} {
    %c0 = arith.constant 0 : index
    %c0_0 = arith.constant 0 : index
    %0 = vector.load %arg0[%c0, %c0_0] : memref<8x64xf32, #tpu.memory_space<vmem>>, vector<8x64xf32>
    %c0_1 = arith.constant 0 : index
    %c0_2 = arith.constant 0 : index
    %1 = vector.load %arg2[%c0_1, %c0_2] : memref<64x256xf32, #tpu.memory_space<vmem>>, vector<64x256xf32>
    %cst = arith.constant dense<0.000000e+00> : vector<8x256xf32>
    %2 = tpu.matmul %0, %1, %cst {dimension_numbers = #tpu.dot_dimension_numbers<[1], [0], [0], [1], [0, 0, 1, 1], [], []>} : vector<8x64xf32>, vector<64x256xf32>, vector<8x256xf32> -> vector<8x256xf32>
    %c0_3 = arith.constant 0 : index
    %c0_4 = arith.constant 0 : index
    %3 = vector.load %arg3[%c0_3, %c0_4] : memref<1x256xf32, #tpu.memory_space<vmem>>, vector<1x256xf32>
    %4 = vector.broadcast %3 : vector<1x256xf32> to vector<8x256xf32>
    %5 = arith.addf %2, %4 : vector<8x256xf32>
    %6 = arith.mulf %5, %5 : vector<8x256xf32>
    %7 = arith.mulf %5, %6 : vector<8x256xf32>
    %cst_5 = arith.constant 4.471500e-02 : f32
    %8 = vector.broadcast %cst_5 : f32 to vector<8x256xf32>
    %9 = arith.mulf %8, %7 : vector<8x256xf32>
    %10 = arith.addf %5, %9 : vector<8x256xf32>
    %cst_6 = arith.constant 0.797884583 : f32
    %11 = vector.broadcast %cst_6 : f32 to vector<8x256xf32>
    %12 = arith.mulf %11, %10 : vector<8x256xf32>
    %13 = math.tanh %12 : vector<8x256xf32>
    %cst_7 = arith.constant 1.000000e+00 : f32
    %14 = vector.broadcast %cst_7 : f32 to vector<8x256xf32>
    %15 = arith.addf %14, %13 : vector<8x256xf32>
    %cst_8 = arith.constant 5.000000e-01 : f32
    %16 = vector.broadcast %cst_8 : f32 to vector<8x256xf32>
    %17 = arith.mulf %16, %15 : vector<8x256xf32>
    %18 = arith.mulf %5, %17 : vector<8x256xf32>
    %c0_9 = arith.constant 0 : index
    %c0_10 = arith.constant 0 : index
    %19 = vector.load %arg4[%c0_9, %c0_10] : memref<256x256xf32, #tpu.memory_space<vmem>>, vector<256x256xf32>
    %cst_11 = arith.constant dense<0.000000e+00> : vector<8x256xf32>
    %20 = tpu.matmul %18, %19, %cst_11 {dimension_numbers = #tpu.dot_dimension_numbers<[1], [0], [0], [1], [0, 0, 1, 1], [], []>} : vector<8x256xf32>, vector<256x256xf32>, vector<8x256xf32> -> vector<8x256xf32>
    %c0_12 = arith.constant 0 : index
    %c0_13 = arith.constant 0 : index
    %21 = vector.load %arg5[%c0_12, %c0_13] : memref<1x256xf32, #tpu.memory_space<vmem>>, vector<1x256xf32>
    %22 = vector.broadcast %21 : vector<1x256xf32> to vector<8x256xf32>
    %23 = arith.addf %20, %22 : vector<8x256xf32>
    %24 = arith.mulf %23, %23 : vector<8x256xf32>
    %25 = arith.mulf %23, %24 : vector<8x256xf32>
    %cst_14 = arith.constant 4.471500e-02 : f32
    %26 = vector.broadcast %cst_14 : f32 to vector<8x256xf32>
    %27 = arith.mulf %26, %25 : vector<8x256xf32>
    %28 = arith.addf %23, %27 : vector<8x256xf32>
    %cst_15 = arith.constant 0.797884583 : f32
    %29 = vector.broadcast %cst_15 : f32 to vector<8x256xf32>
    %30 = arith.mulf %29, %28 : vector<8x256xf32>
    %31 = math.tanh %30 : vector<8x256xf32>
    %cst_16 = arith.constant 1.000000e+00 : f32
    %32 = vector.broadcast %cst_16 : f32 to vector<8x256xf32>
    %33 = arith.addf %32, %31 : vector<8x256xf32>
    %cst_17 = arith.constant 5.000000e-01 : f32
    %34 = vector.broadcast %cst_17 : f32 to vector<8x256xf32>
    %35 = arith.mulf %34, %33 : vector<8x256xf32>
    %36 = arith.mulf %23, %35 : vector<8x256xf32>
    %c0_18 = arith.constant 0 : index
    %c0_19 = arith.constant 0 : index
    %37 = vector.load %arg6[%c0_18, %c0_19] : memref<256x256xf32, #tpu.memory_space<vmem>>, vector<256x256xf32>
    %cst_20 = arith.constant dense<0.000000e+00> : vector<8x256xf32>
    %38 = tpu.matmul %36, %37, %cst_20 {dimension_numbers = #tpu.dot_dimension_numbers<[1], [0], [0], [1], [0, 0, 1, 1], [], []>} : vector<8x256xf32>, vector<256x256xf32>, vector<8x256xf32> -> vector<8x256xf32>
    %c0_21 = arith.constant 0 : index
    %c0_22 = arith.constant 0 : index
    %39 = vector.load %arg7[%c0_21, %c0_22] : memref<1x256xf32, #tpu.memory_space<vmem>>, vector<1x256xf32>
    %40 = vector.broadcast %39 : vector<1x256xf32> to vector<8x256xf32>
    %41 = arith.addf %38, %40 : vector<8x256xf32>
    %42 = arith.mulf %41, %41 : vector<8x256xf32>
    %43 = arith.mulf %41, %42 : vector<8x256xf32>
    %cst_23 = arith.constant 4.471500e-02 : f32
    %44 = vector.broadcast %cst_23 : f32 to vector<8x256xf32>
    %45 = arith.mulf %44, %43 : vector<8x256xf32>
    %46 = arith.addf %41, %45 : vector<8x256xf32>
    %cst_24 = arith.constant 0.797884583 : f32
    %47 = vector.broadcast %cst_24 : f32 to vector<8x256xf32>
    %48 = arith.mulf %47, %46 : vector<8x256xf32>
    %49 = math.tanh %48 : vector<8x256xf32>
    %cst_25 = arith.constant 1.000000e+00 : f32
    %50 = vector.broadcast %cst_25 : f32 to vector<8x256xf32>
    %51 = arith.addf %50, %49 : vector<8x256xf32>
    %cst_26 = arith.constant 5.000000e-01 : f32
    %52 = vector.broadcast %cst_26 : f32 to vector<8x256xf32>
    %53 = arith.mulf %52, %51 : vector<8x256xf32>
    %54 = arith.mulf %41, %53 : vector<8x256xf32>
    %c0_27 = arith.constant 0 : index
    %c0_28 = arith.constant 0 : index
    %55 = vector.load %arg8[%c0_27, %c0_28] : memref<256x64xf32, #tpu.memory_space<vmem>>, vector<256x64xf32>
    %cst_29 = arith.constant dense<0.000000e+00> : vector<8x64xf32>
    %56 = tpu.matmul %54, %55, %cst_29 {dimension_numbers = #tpu.dot_dimension_numbers<[1], [0], [0], [1], [0, 0, 1, 1], [], []>} : vector<8x256xf32>, vector<256x64xf32>, vector<8x64xf32> -> vector<8x64xf32>
    %c0_30 = arith.constant 0 : index
    %c0_31 = arith.constant 0 : index
    %57 = vector.load %arg9[%c0_30, %c0_31] : memref<1x64xf32, #tpu.memory_space<vmem>>, vector<1x64xf32>
    %58 = vector.broadcast %57 : vector<1x64xf32> to vector<8x64xf32>
    %59 = arith.addf %56, %58 : vector<8x64xf32>
    %c0_32 = arith.constant 0 : index
    %c0_33 = arith.constant 0 : index
    %60 = vector.load %arg10[%c0_32, %c0_33] : memref<64x128xf32, #tpu.memory_space<vmem>>, vector<64x128xf32>
    %cst_34 = arith.constant dense<0.000000e+00> : vector<8x128xf32>
    %61 = tpu.matmul %59, %60, %cst_34 {dimension_numbers = #tpu.dot_dimension_numbers<[1], [0], [0], [1], [0, 0, 1, 1], [], []>} : vector<8x64xf32>, vector<64x128xf32>, vector<8x128xf32> -> vector<8x128xf32>
    %c0_35 = arith.constant 0 : index
    %c0_36 = arith.constant 0 : index
    %62 = vector.load %arg1[%c0_35, %c0_36] : memref<8x16xf32, #tpu.memory_space<vmem>>, vector<8x16xf32>
    %c0_37 = arith.constant 0 : index
    %c0_38 = arith.constant 0 : index
    %63 = vector.load %arg11[%c0_37, %c0_38] : memref<16x128xf32, #tpu.memory_space<vmem>>, vector<16x128xf32>
    %cst_39 = arith.constant dense<0.000000e+00> : vector<8x128xf32>
    %64 = tpu.matmul %62, %63, %cst_39 {dimension_numbers = #tpu.dot_dimension_numbers<[1], [0], [0], [1], [0, 0, 1, 1], [], []>} : vector<8x16xf32>, vector<16x128xf32>, vector<8x128xf32> -> vector<8x128xf32>
    %65 = arith.addf %61, %64 : vector<8x128xf32>
    %c0_40 = arith.constant 0 : index
    %c0_41 = arith.constant 0 : index
    %66 = vector.load %arg12[%c0_40, %c0_41] : memref<1x128xf32, #tpu.memory_space<vmem>>, vector<1x128xf32>
    %67 = vector.broadcast %66 : vector<1x128xf32> to vector<8x128xf32>
    %68 = arith.addf %65, %67 : vector<8x128xf32>
    %cst_42 = arith.constant dense<0.000000e+00> : vector<128xf32>
    %69 = vector.multi_reduction <add>, %68, %cst_42 [0] : vector<8x128xf32> to vector<128xf32>
    %70 = vector.shape_cast %69 : vector<128xf32> to vector<1x128xf32>
    %cst_43 = arith.constant 8.000000e+00 : f32
    %71 = vector.broadcast %cst_43 : f32 to vector<1x128xf32>
    %72 = arith.divf %70, %71 : vector<1x128xf32>
    %73 = vector.broadcast %72 : vector<1x128xf32> to vector<8x128xf32>
    %74 = arith.subf %68, %73 : vector<8x128xf32>
    %75 = arith.mulf %74, %74 : vector<8x128xf32>
    %cst_44 = arith.constant dense<0.000000e+00> : vector<128xf32>
    %76 = vector.multi_reduction <add>, %75, %cst_44 [0] : vector<8x128xf32> to vector<128xf32>
    %77 = vector.shape_cast %76 : vector<128xf32> to vector<1x128xf32>
    %cst_45 = arith.constant 8.000000e+00 : f32
    %78 = vector.broadcast %cst_45 : f32 to vector<1x128xf32>
    %79 = arith.divf %77, %78 : vector<1x128xf32>
    %80 = vector.broadcast %72 : vector<1x128xf32> to vector<8x128xf32>
    %81 = arith.subf %68, %80 : vector<8x128xf32>
    %cst_46 = arith.constant 9.99999974E-6 : f32
    %82 = vector.broadcast %cst_46 : f32 to vector<1x128xf32>
    %83 = arith.addf %79, %82 : vector<1x128xf32>
    %84 = math.rsqrt %83 : vector<1x128xf32>
    %85 = vector.broadcast %84 : vector<1x128xf32> to vector<8x128xf32>
    %86 = arith.mulf %81, %85 : vector<8x128xf32>
    %c0_47 = arith.constant 0 : index
    %c0_48 = arith.constant 0 : index
    %c0_49 = arith.constant 0 : index
    %87 = vector.load %arg15[%c0_47, %c0_48, %c0_49] : memref<4x1x128xf32, #tpu.memory_space<vmem>>, vector<1x1x128xf32>
    %88 = vector.shape_cast %87 : vector<1x1x128xf32> to vector<1x128xf32>
    %89 = vector.broadcast %88 : vector<1x128xf32> to vector<8x128xf32>
    %90 = arith.mulf %86, %89 : vector<8x128xf32>
    %c0_50 = arith.constant 0 : index
    %c0_51 = arith.constant 0 : index
    %c0_52 = arith.constant 0 : index
    %91 = vector.load %arg16[%c0_50, %c0_51, %c0_52] : memref<4x1x128xf32, #tpu.memory_space<vmem>>, vector<1x1x128xf32>
    %92 = vector.shape_cast %91 : vector<1x1x128xf32> to vector<1x128xf32>
    %93 = vector.broadcast %92 : vector<1x128xf32> to vector<8x128xf32>
    %94 = arith.addf %90, %93 : vector<8x128xf32>
    %95 = arith.mulf %94, %94 : vector<8x128xf32>
    %96 = arith.mulf %94, %95 : vector<8x128xf32>
    %cst_53 = arith.constant 4.471500e-02 : f32
    %97 = vector.broadcast %cst_53 : f32 to vector<8x128xf32>
    %98 = arith.mulf %97, %96 : vector<8x128xf32>
    %99 = arith.addf %94, %98 : vector<8x128xf32>
    %cst_54 = arith.constant 0.797884583 : f32
    %100 = vector.broadcast %cst_54 : f32 to vector<8x128xf32>
    %101 = arith.mulf %100, %99 : vector<8x128xf32>
    %102 = math.tanh %101 : vector<8x128xf32>
    %cst_55 = arith.constant 1.000000e+00 : f32
    %103 = vector.broadcast %cst_55 : f32 to vector<8x128xf32>
    %104 = arith.addf %103, %102 : vector<8x128xf32>
    %cst_56 = arith.constant 5.000000e-01 : f32
    %105 = vector.broadcast %cst_56 : f32 to vector<8x128xf32>
    %106 = arith.mulf %105, %104 : vector<8x128xf32>
    %107 = arith.mulf %94, %106 : vector<8x128xf32>
    %c0_57 = arith.constant 0 : index
    %c0_58 = arith.constant 0 : index
    %c0_59 = arith.constant 0 : index
    %108 = vector.load %arg13[%c0_57, %c0_58, %c0_59] : memref<4x128x128xf32, #tpu.memory_space<vmem>>, vector<1x128x128xf32>
    %109 = vector.shape_cast %108 : vector<1x128x128xf32> to vector<128x128xf32>
    %cst_60 = arith.constant dense<0.000000e+00> : vector<8x128xf32>
    %110 = tpu.matmul %107, %109, %cst_60 {dimension_numbers = #tpu.dot_dimension_numbers<[1], [0], [0], [1], [0, 0, 1, 1], [], []>} : vector<8x128xf32>, vector<128x128xf32>, vector<8x128xf32> -> vector<8x128xf32>
    %c0_61 = arith.constant 0 : index
    %c0_62 = arith.constant 0 : index
    %c0_63 = arith.constant 0 : index
    %111 = vector.load %arg14[%c0_61, %c0_62, %c0_63] : memref<4x1x128xf32, #tpu.memory_space<vmem>>, vector<1x1x128xf32>
    %112 = vector.shape_cast %111 : vector<1x1x128xf32> to vector<1x128xf32>
    %113 = vector.broadcast %112 : vector<1x128xf32> to vector<8x128xf32>
    %114 = arith.addf %110, %113 : vector<8x128xf32>
    %cst_64 = arith.constant dense<0.000000e+00> : vector<128xf32>
    %115 = vector.multi_reduction <add>, %114, %cst_64 [0] : vector<8x128xf32> to vector<128xf32>
    %116 = vector.shape_cast %115 : vector<128xf32> to vector<1x128xf32>
    %cst_65 = arith.constant 8.000000e+00 : f32
    %117 = vector.broadcast %cst_65 : f32 to vector<1x128xf32>
    %118 = arith.divf %116, %117 : vector<1x128xf32>
    %119 = vector.broadcast %118 : vector<1x128xf32> to vector<8x128xf32>
    %120 = arith.subf %114, %119 : vector<8x128xf32>
    %121 = arith.mulf %120, %120 : vector<8x128xf32>
    %cst_66 = arith.constant dense<0.000000e+00> : vector<128xf32>
    %122 = vector.multi_reduction <add>, %121, %cst_66 [0] : vector<8x128xf32> to vector<128xf32>
    %123 = vector.shape_cast %122 : vector<128xf32> to vector<1x128xf32>
    %cst_67 = arith.constant 8.000000e+00 : f32
    %124 = vector.broadcast %cst_67 : f32 to vector<1x128xf32>
    %125 = arith.divf %123, %124 : vector<1x128xf32>
    %126 = vector.broadcast %118 : vector<1x128xf32> to vector<8x128xf32>
    %127 = arith.subf %114, %126 : vector<8x128xf32>
    %cst_68 = arith.constant 9.99999974E-6 : f32
    %128 = vector.broadcast %cst_68 : f32 to vector<1x128xf32>
    %129 = arith.addf %125, %128 : vector<1x128xf32>
    %130 = math.rsqrt %129 : vector<1x128xf32>
    %131 = vector.broadcast %130 : vector<1x128xf32> to vector<8x128xf32>
    %132 = arith.mulf %127, %131 : vector<8x128xf32>
    %c1 = arith.constant 1 : index
    %c0_69 = arith.constant 0 : index
    %c0_70 = arith.constant 0 : index
    %133 = vector.load %arg15[%c1, %c0_69, %c0_70] : memref<4x1x128xf32, #tpu.memory_space<vmem>>, vector<1x1x128xf32>
    %134 = vector.shape_cast %133 : vector<1x1x128xf32> to vector<1x128xf32>
    %135 = vector.broadcast %134 : vector<1x128xf32> to vector<8x128xf32>
    %136 = arith.mulf %132, %135 : vector<8x128xf32>
    %c1_71 = arith.constant 1 : index
    %c0_72 = arith.constant 0 : index
    %c0_73 = arith.constant 0 : index
    %137 = vector.load %arg16[%c1_71, %c0_72, %c0_73] : memref<4x1x128xf32, #tpu.memory_space<vmem>>, vector<1x1x128xf32>
    %138 = vector.shape_cast %137 : vector<1x1x128xf32> to vector<1x128xf32>
    %139 = vector.broadcast %138 : vector<1x128xf32> to vector<8x128xf32>
    %140 = arith.addf %136, %139 : vector<8x128xf32>
    %141 = arith.mulf %140, %140 : vector<8x128xf32>
    %142 = arith.mulf %140, %141 : vector<8x128xf32>
    %cst_74 = arith.constant 4.471500e-02 : f32
    %143 = vector.broadcast %cst_74 : f32 to vector<8x128xf32>
    %144 = arith.mulf %143, %142 : vector<8x128xf32>
    %145 = arith.addf %140, %144 : vector<8x128xf32>
    %cst_75 = arith.constant 0.797884583 : f32
    %146 = vector.broadcast %cst_75 : f32 to vector<8x128xf32>
    %147 = arith.mulf %146, %145 : vector<8x128xf32>
    %148 = math.tanh %147 : vector<8x128xf32>
    %cst_76 = arith.constant 1.000000e+00 : f32
    %149 = vector.broadcast %cst_76 : f32 to vector<8x128xf32>
    %150 = arith.addf %149, %148 : vector<8x128xf32>
    %cst_77 = arith.constant 5.000000e-01 : f32
    %151 = vector.broadcast %cst_77 : f32 to vector<8x128xf32>
    %152 = arith.mulf %151, %150 : vector<8x128xf32>
    %153 = arith.mulf %140, %152 : vector<8x128xf32>
    %c1_78 = arith.constant 1 : index
    %c0_79 = arith.constant 0 : index
    %c0_80 = arith.constant 0 : index
    %154 = vector.load %arg13[%c1_78, %c0_79, %c0_80] : memref<4x128x128xf32, #tpu.memory_space<vmem>>, vector<1x128x128xf32>
    %155 = vector.shape_cast %154 : vector<1x128x128xf32> to vector<128x128xf32>
    %cst_81 = arith.constant dense<0.000000e+00> : vector<8x128xf32>
    %156 = tpu.matmul %153, %155, %cst_81 {dimension_numbers = #tpu.dot_dimension_numbers<[1], [0], [0], [1], [0, 0, 1, 1], [], []>} : vector<8x128xf32>, vector<128x128xf32>, vector<8x128xf32> -> vector<8x128xf32>
    %c1_82 = arith.constant 1 : index
    %c0_83 = arith.constant 0 : index
    %c0_84 = arith.constant 0 : index
    %157 = vector.load %arg14[%c1_82, %c0_83, %c0_84] : memref<4x1x128xf32, #tpu.memory_space<vmem>>, vector<1x1x128xf32>
    %158 = vector.shape_cast %157 : vector<1x1x128xf32> to vector<1x128xf32>
    %159 = vector.broadcast %158 : vector<1x128xf32> to vector<8x128xf32>
    %160 = arith.addf %156, %159 : vector<8x128xf32>
    %161 = arith.addf %68, %160 : vector<8x128xf32>
    %cst_85 = arith.constant dense<0.000000e+00> : vector<128xf32>
    %162 = vector.multi_reduction <add>, %161, %cst_85 [0] : vector<8x128xf32> to vector<128xf32>
    %163 = vector.shape_cast %162 : vector<128xf32> to vector<1x128xf32>
    %cst_86 = arith.constant 8.000000e+00 : f32
    %164 = vector.broadcast %cst_86 : f32 to vector<1x128xf32>
    %165 = arith.divf %163, %164 : vector<1x128xf32>
    %166 = vector.broadcast %165 : vector<1x128xf32> to vector<8x128xf32>
    %167 = arith.subf %161, %166 : vector<8x128xf32>
    %168 = arith.mulf %167, %167 : vector<8x128xf32>
    %cst_87 = arith.constant dense<0.000000e+00> : vector<128xf32>
    %169 = vector.multi_reduction <add>, %168, %cst_87 [0] : vector<8x128xf32> to vector<128xf32>
    %170 = vector.shape_cast %169 : vector<128xf32> to vector<1x128xf32>
    %cst_88 = arith.constant 8.000000e+00 : f32
    %171 = vector.broadcast %cst_88 : f32 to vector<1x128xf32>
    %172 = arith.divf %170, %171 : vector<1x128xf32>
    %173 = vector.broadcast %165 : vector<1x128xf32> to vector<8x128xf32>
    %174 = arith.subf %161, %173 : vector<8x128xf32>
    %cst_89 = arith.constant 9.99999974E-6 : f32
    %175 = vector.broadcast %cst_89 : f32 to vector<1x128xf32>
    %176 = arith.addf %172, %175 : vector<1x128xf32>
    %177 = math.rsqrt %176 : vector<1x128xf32>
    %178 = vector.broadcast %177 : vector<1x128xf32> to vector<8x128xf32>
    %179 = arith.mulf %174, %178 : vector<8x128xf32>
    %c2 = arith.constant 2 : index
    %c0_90 = arith.constant 0 : index
    %c0_91 = arith.constant 0 : index
    %180 = vector.load %arg15[%c2, %c0_90, %c0_91] : memref<4x1x128xf32, #tpu.memory_space<vmem>>, vector<1x1x128xf32>
    %181 = vector.shape_cast %180 : vector<1x1x128xf32> to vector<1x128xf32>
    %182 = vector.broadcast %181 : vector<1x128xf32> to vector<8x128xf32>
    %183 = arith.mulf %179, %182 : vector<8x128xf32>
    %c2_92 = arith.constant 2 : index
    %c0_93 = arith.constant 0 : index
    %c0_94 = arith.constant 0 : index
    %184 = vector.load %arg16[%c2_92, %c0_93, %c0_94] : memref<4x1x128xf32, #tpu.memory_space<vmem>>, vector<1x1x128xf32>
    %185 = vector.shape_cast %184 : vector<1x1x128xf32> to vector<1x128xf32>
    %186 = vector.broadcast %185 : vector<1x128xf32> to vector<8x128xf32>
    %187 = arith.addf %183, %186 : vector<8x128xf32>
    %188 = arith.mulf %187, %187 : vector<8x128xf32>
    %189 = arith.mulf %187, %188 : vector<8x128xf32>
    %cst_95 = arith.constant 4.471500e-02 : f32
    %190 = vector.broadcast %cst_95 : f32 to vector<8x128xf32>
    %191 = arith.mulf %190, %189 : vector<8x128xf32>
    %192 = arith.addf %187, %191 : vector<8x128xf32>
    %cst_96 = arith.constant 0.797884583 : f32
    %193 = vector.broadcast %cst_96 : f32 to vector<8x128xf32>
    %194 = arith.mulf %193, %192 : vector<8x128xf32>
    %195 = math.tanh %194 : vector<8x128xf32>
    %cst_97 = arith.constant 1.000000e+00 : f32
    %196 = vector.broadcast %cst_97 : f32 to vector<8x128xf32>
    %197 = arith.addf %196, %195 : vector<8x128xf32>
    %cst_98 = arith.constant 5.000000e-01 : f32
    %198 = vector.broadcast %cst_98 : f32 to vector<8x128xf32>
    %199 = arith.mulf %198, %197 : vector<8x128xf32>
    %200 = arith.mulf %187, %199 : vector<8x128xf32>
    %c2_99 = arith.constant 2 : index
    %c0_100 = arith.constant 0 : index
    %c0_101 = arith.constant 0 : index
    %201 = vector.load %arg13[%c2_99, %c0_100, %c0_101] : memref<4x128x128xf32, #tpu.memory_space<vmem>>, vector<1x128x128xf32>
    %202 = vector.shape_cast %201 : vector<1x128x128xf32> to vector<128x128xf32>
    %cst_102 = arith.constant dense<0.000000e+00> : vector<8x128xf32>
    %203 = tpu.matmul %200, %202, %cst_102 {dimension_numbers = #tpu.dot_dimension_numbers<[1], [0], [0], [1], [0, 0, 1, 1], [], []>} : vector<8x128xf32>, vector<128x128xf32>, vector<8x128xf32> -> vector<8x128xf32>
    %c2_103 = arith.constant 2 : index
    %c0_104 = arith.constant 0 : index
    %c0_105 = arith.constant 0 : index
    %204 = vector.load %arg14[%c2_103, %c0_104, %c0_105] : memref<4x1x128xf32, #tpu.memory_space<vmem>>, vector<1x1x128xf32>
    %205 = vector.shape_cast %204 : vector<1x1x128xf32> to vector<1x128xf32>
    %206 = vector.broadcast %205 : vector<1x128xf32> to vector<8x128xf32>
    %207 = arith.addf %203, %206 : vector<8x128xf32>
    %cst_106 = arith.constant dense<0.000000e+00> : vector<128xf32>
    %208 = vector.multi_reduction <add>, %207, %cst_106 [0] : vector<8x128xf32> to vector<128xf32>
    %209 = vector.shape_cast %208 : vector<128xf32> to vector<1x128xf32>
    %cst_107 = arith.constant 8.000000e+00 : f32
    %210 = vector.broadcast %cst_107 : f32 to vector<1x128xf32>
    %211 = arith.divf %209, %210 : vector<1x128xf32>
    %212 = vector.broadcast %211 : vector<1x128xf32> to vector<8x128xf32>
    %213 = arith.subf %207, %212 : vector<8x128xf32>
    %214 = arith.mulf %213, %213 : vector<8x128xf32>
    %cst_108 = arith.constant dense<0.000000e+00> : vector<128xf32>
    %215 = vector.multi_reduction <add>, %214, %cst_108 [0] : vector<8x128xf32> to vector<128xf32>
    %216 = vector.shape_cast %215 : vector<128xf32> to vector<1x128xf32>
    %cst_109 = arith.constant 8.000000e+00 : f32
    %217 = vector.broadcast %cst_109 : f32 to vector<1x128xf32>
    %218 = arith.divf %216, %217 : vector<1x128xf32>
    %219 = vector.broadcast %211 : vector<1x128xf32> to vector<8x128xf32>
    %220 = arith.subf %207, %219 : vector<8x128xf32>
    %cst_110 = arith.constant 9.99999974E-6 : f32
    %221 = vector.broadcast %cst_110 : f32 to vector<1x128xf32>
    %222 = arith.addf %218, %221 : vector<1x128xf32>
    %223 = math.rsqrt %222 : vector<1x128xf32>
    %224 = vector.broadcast %223 : vector<1x128xf32> to vector<8x128xf32>
    %225 = arith.mulf %220, %224 : vector<8x128xf32>
    %c3 = arith.constant 3 : index
    %c0_111 = arith.constant 0 : index
    %c0_112 = arith.constant 0 : index
    %226 = vector.load %arg15[%c3, %c0_111, %c0_112] : memref<4x1x128xf32, #tpu.memory_space<vmem>>, vector<1x1x128xf32>
    %227 = vector.shape_cast %226 : vector<1x1x128xf32> to vector<1x128xf32>
    %228 = vector.broadcast %227 : vector<1x128xf32> to vector<8x128xf32>
    %229 = arith.mulf %225, %228 : vector<8x128xf32>
    %c3_113 = arith.constant 3 : index
    %c0_114 = arith.constant 0 : index
    %c0_115 = arith.constant 0 : index
    %230 = vector.load %arg16[%c3_113, %c0_114, %c0_115] : memref<4x1x128xf32, #tpu.memory_space<vmem>>, vector<1x1x128xf32>
    %231 = vector.shape_cast %230 : vector<1x1x128xf32> to vector<1x128xf32>
    %232 = vector.broadcast %231 : vector<1x128xf32> to vector<8x128xf32>
    %233 = arith.addf %229, %232 : vector<8x128xf32>
    %234 = arith.mulf %233, %233 : vector<8x128xf32>
    %235 = arith.mulf %233, %234 : vector<8x128xf32>
    %cst_116 = arith.constant 4.471500e-02 : f32
    %236 = vector.broadcast %cst_116 : f32 to vector<8x128xf32>
    %237 = arith.mulf %236, %235 : vector<8x128xf32>
    %238 = arith.addf %233, %237 : vector<8x128xf32>
    %cst_117 = arith.constant 0.797884583 : f32
    %239 = vector.broadcast %cst_117 : f32 to vector<8x128xf32>
    %240 = arith.mulf %239, %238 : vector<8x128xf32>
    %241 = math.tanh %240 : vector<8x128xf32>
    %cst_118 = arith.constant 1.000000e+00 : f32
    %242 = vector.broadcast %cst_118 : f32 to vector<8x128xf32>
    %243 = arith.addf %242, %241 : vector<8x128xf32>
    %cst_119 = arith.constant 5.000000e-01 : f32
    %244 = vector.broadcast %cst_119 : f32 to vector<8x128xf32>
    %245 = arith.mulf %244, %243 : vector<8x128xf32>
    %246 = arith.mulf %233, %245 : vector<8x128xf32>
    %c3_120 = arith.constant 3 : index
    %c0_121 = arith.constant 0 : index
    %c0_122 = arith.constant 0 : index
    %247 = vector.load %arg13[%c3_120, %c0_121, %c0_122] : memref<4x128x128xf32, #tpu.memory_space<vmem>>, vector<1x128x128xf32>
    %248 = vector.shape_cast %247 : vector<1x128x128xf32> to vector<128x128xf32>
    %cst_123 = arith.constant dense<0.000000e+00> : vector<8x128xf32>
    %249 = tpu.matmul %246, %248, %cst_123 {dimension_numbers = #tpu.dot_dimension_numbers<[1], [0], [0], [1], [0, 0, 1, 1], [], []>} : vector<8x128xf32>, vector<128x128xf32>, vector<8x128xf32> -> vector<8x128xf32>
    %c3_124 = arith.constant 3 : index
    %c0_125 = arith.constant 0 : index
    %c0_126 = arith.constant 0 : index
    %250 = vector.load %arg14[%c3_124, %c0_125, %c0_126] : memref<4x1x128xf32, #tpu.memory_space<vmem>>, vector<1x1x128xf32>
    %251 = vector.shape_cast %250 : vector<1x1x128xf32> to vector<1x128xf32>
    %252 = vector.broadcast %251 : vector<1x128xf32> to vector<8x128xf32>
    %253 = arith.addf %249, %252 : vector<8x128xf32>
    %254 = arith.addf %161, %253 : vector<8x128xf32>
    %c0_127 = arith.constant 0 : index
    %c0_128 = arith.constant 0 : index
    %255 = vector.load %arg17[%c0_127, %c0_128] : memref<128x8xf32, #tpu.memory_space<vmem>>, vector<128x8xf32>
    %cst_129 = arith.constant dense<0.000000e+00> : vector<8x8xf32>
    %256 = tpu.matmul %254, %255, %cst_129 {dimension_numbers = #tpu.dot_dimension_numbers<[1], [0], [0], [1], [0, 0, 1, 1], [], []>} : vector<8x128xf32>, vector<128x8xf32>, vector<8x8xf32> -> vector<8x8xf32>
    %c0_130 = arith.constant 0 : index
    %c0_131 = arith.constant 0 : index
    %257 = vector.load %arg18[%c0_130, %c0_131] : memref<1x8xf32, #tpu.memory_space<vmem>>, vector<1x8xf32>
    %258 = vector.broadcast %257 : vector<1x8xf32> to vector<8x8xf32>
    %259 = arith.addf %256, %258 : vector<8x8xf32>
    %c0_132 = arith.constant 0 : index
    %c0_133 = arith.constant 0 : index
    %260 = vector.load %arg19[%c0_132, %c0_133] : memref<8x8xf32, #tpu.memory_space<vmem>>, vector<8x8xf32>
    tpu.vector_store %arg19[%c0_132, %c0_133], %259 {strides = array<i32>} : memref<8x8xf32, #tpu.memory_space<vmem>>, vector<8x8xf32>,
    return
  }
}

</mosaic_0001>

<llo_original>
// kernel: network_with_priors_forward.1
$region0: #{network_with_priors_forward.1}
  #allocation0 [shape = 'u32[]', space=smem, size = 0x4, offset = 0x4, fixed_abs, tag = 'smem constant byte address 0x4 - core index']
  #allocation1 [shape = 'u32[144,128]{1,0:T(1,128)}', space=vmem, size = 0x12000, scoped, tag = 'internal scratch']
  %s0 = inlined_call_operand.vmem [shape: f32[8,64], index: 0, kind: input, shape index: {}]
  %s1 = inlined_call_operand.hbm [shape: f32[8,16], index: 1, kind: input, shape index: {}]
  %s2 = inlined_call_operand.hbm [shape: f32[64,256], index: 2, kind: input, shape index: {}]
  %s3 = inlined_call_operand.vmem [shape: f32[1,256], index: 3, kind: input, shape index: {}, may-alias: {3,5,7}]
  %s4 = inlined_call_operand.hbm [shape: f32[256,256], index: 4, kind: input, shape index: {}]
  %s5 = inlined_call_operand.vmem [shape: f32[1,256], index: 5, kind: input, shape index: {}, may-alias: {3,5,7}]
  %s6 = inlined_call_operand.hbm [shape: f32[256,256], index: 6, kind: input, shape index: {}]
  %s7 = inlined_call_operand.vmem [shape: f32[1,256], index: 7, kind: input, shape index: {}, may-alias: {3,5,7}]
  %s8 = inlined_call_operand.hbm [shape: f32[256,64], index: 8, kind: input, shape index: {}]
  %s9 = inlined_call_operand.vmem [shape: f32[1,64], index: 9, kind: input, shape index: {}]
  %s10 = inlined_call_operand.hbm [shape: f32[64,128], index: 10, kind: input, shape index: {}]
  %s11 = inlined_call_operand.vmem [shape: f32[16,128], index: 11, kind: input, shape index: {}]
  %s12 = inlined_call_operand.vmem [shape: f32[1,128], index: 12, kind: input, shape index: {}]
  %s13 = inlined_call_operand.hbm [shape: f32[4,128,128], index: 13, kind: input, shape index: {}]
  %s14 = inlined_call_operand.vmem [shape: f32[4,1,128], index: 14, kind: input, shape index: {}]
  %s15 = inlined_call_operand.vmem [shape: f32[4,1,128], index: 15, kind: input, shape index: {}]
  %s16 = inlined_call_operand.vmem [shape: f32[4,1,128], index: 16, kind: input, shape index: {}]
  %s17 = inlined_call_operand.hbm [shape: f32[128,8], index: 17, kind: input, shape index: {}]
  %s18 = inlined_call_operand.vmem [shape: f32[1,8], index: 18, kind: input, shape index: {}]
  %s19 = inlined_call_operand.hbm [shape: f32[8,8], index: 19, kind: output, shape index: {}]
  %s20 = sld [smem:[#allocation0]]
  $region118: #{network_with_priors_forward.1} parent=0
    _
  %s22 = ssub.s32 1, %s20
  %s23 = scalar_select 0, %s22, %s20
  $region1: #{network_with_priors_forward.1} parent=0
    #allocation2 [shape = 'u8[4096]{0}', space=vmem, size = 0x1000, scoped, tag = 'input window, operand 1, single buffered']
    #allocation3 [shape = 's32[1]{0}', space=sflag, size = 0x4, scoped, tag = 'scoped memory for network_with_priors_forward.1']
    #allocation4 [shape = 's32[1]{0}', space=sflag, size = 0x4, scoped, tag = 'scoped memory for network_with_priors_forward.1']
    #allocation5 [shape = 'u8[65536]{0}', space=vmem, size = 0x10000, scoped, tag = 'input window, operand 2, single buffered']
    #allocation6 [shape = 's32[1]{0}', space=sflag, size = 0x4, scoped, tag = 'scoped memory for network_with_priors_forward.1']
    #allocation7 [shape = 'u8[262144]{0}', space=vmem, size = 0x40000, scoped, tag = 'input window, operand 4, single buffered']
    #allocation8 [shape = 'u8[262144]{0}', space=vmem, size = 0x40000, scoped, tag = 'input window, operand 6, single buffered']
    #allocation9 [shape = 's32[1]{0}', space=sflag, size = 0x4, scoped, tag = 'scoped memory for network_with_priors_forward.1']
    #allocation10 [shape = 'u8[131072]{0}', space=vmem, size = 0x20000, scoped, tag = 'input window, operand 8, single buffered']
    #allocation11 [shape = 'u8[32768]{0}', space=vmem, size = 0x8000, scoped, tag = 'input window, operand 10, single buffered']
    #allocation12 [shape = 's32[1]{0}', space=sflag, size = 0x4, scoped, tag = 'scoped memory for network_with_priors_forward.1']
    #allocation13 [shape = 'u8[262144]{0}', space=vmem, size = 0x40000, scoped, tag = 'input window, operand 13, single buffered']
    #allocation14 [shape = 'u8[65536]{0}', space=vmem, size = 0x10000, scoped, tag = 'input window, operand 17, single buffered']
    #allocation15 [shape = 's32[1]{0}', space=sflag, size = 0x4, scoped, tag = 'scoped memory for network_with_priors_forward.1']
    #allocation16 [shape = 'u8[4096]{0}', space=vmem, size = 0x1000, scoped, tag = 'output window, operand 0, single buffered']
    %24 = vsyncpa [#allocation3], 0
    %25 = vsyncpa [#allocation6], 0
    %26 = vsyncpa [#allocation9], 0
    %27 = vsyncpa [#allocation12], 0
    %28 = vsyncpa [#allocation15], 0
    %29 = vsyncpa [#allocation4], 0
    // Predicated region
    $region2: #{network_with_priors_forward.1} parent=1 // pred_check
      _
    $region3: #{network_with_priors_forward.1} parent=1 // pred_check_branch
      %31 = sbr.rel (0) target = $region5
    $region4: #{network_with_priors_forward.1} parent=1 // pred_region
      _
    $region5: #{network_with_priors_forward.1} parent=1 // pred_fallthru
      _
    // Predicated region
    $region6: #{network_with_priors_forward.1} parent=1 // pred_check
      _
    $region7: #{network_with_priors_forward.1} parent=1 // pred_check_branch
      %33 = sbr.rel (0) target = $region9
    $region8: #{network_with_priors_forward.1} parent=1 // pred_region
      %s35 = ssub.s32 128, 128
      %36 = vsyncadd [#allocation3], %s35
      %s38 = sshll.u32 [#allocation2], 4
      %s39 = int_to_ptr.vmem [resolvable:$true] %s38
      %41 = dma.hbm_to_vmem [thread:$0]  %s1, 128, %s39, [#allocation3]
    $region9: #{network_with_priors_forward.1} parent=1 // pred_fallthru
      _
    // Predicated region
    $region10: #{network_with_priors_forward.1} parent=1 // pred_check
      _
    $region11: #{network_with_priors_forward.1} parent=1 // pred_check_branch
      %43 = sbr.rel (0) target = $region13
    $region12: #{network_with_priors_forward.1} parent=1 // pred_region
      %s45 = ssub.s32 2048, 2048
      %46 = vsyncadd [#allocation6], %s45
      %s47 = sshll.u32 [#allocation5], 4
      %s48 = int_to_ptr.vmem [resolvable:$true] %s47
      %53 = dma.hbm_to_vmem [thread:$0]  %s2, 2048, %s48, [#allocation6], 256, 256, 16
    $region13: #{network_with_priors_forward.1} parent=1 // pred_fallthru
      _
    // Predicated region
    $region14: #{network_with_priors_forward.1} parent=1 // pred_check
      _
    $region15: #{network_with_priors_forward.1} parent=1 // pred_check_branch
      %55 = sbr.rel (0) target = $region17
    $region16: #{network_with_priors_forward.1} parent=1 // pred_region
      _
    $region17: #{network_with_priors_forward.1} parent=1 // pred_fallthru
      _
    // Predicated region
    $region18: #{network_with_priors_forward.1} parent=1 // pred_check
      _
    $region19: #{network_with_priors_forward.1} parent=1 // pred_check_branch
      %57 = sbr.rel (0) target = $region21
    $region20: #{network_with_priors_forward.1} parent=1 // pred_region
      %s59 = ssub.s32 8192, 8192
      %60 = vsyncadd [#allocation6], %s59
      %s61 = sshll.u32 [#allocation7], 4
      %s62 = int_to_ptr.vmem [resolvable:$true] %s61
      %67 = dma.hbm_to_vmem [thread:$0]  %s4, 8192, %s62, [#allocation6], 256, 256, 16
    $region21: #{network_with_priors_forward.1} parent=1 // pred_fallthru
      _
    // Predicated region
    $region22: #{network_with_priors_forward.1} parent=1 // pred_check
      _
    $region23: #{network_with_priors_forward.1} parent=1 // pred_check_branch
      %69 = sbr.rel (0) target = $region25
    $region24: #{network_with_priors_forward.1} parent=1 // pred_region
      _
    $region25: #{network_with_priors_forward.1} parent=1 // pred_fallthru
      _
    // Predicated region
    $region26: #{network_with_priors_forward.1} parent=1 // pred_check
      _
    $region27: #{network_with_priors_forward.1} parent=1 // pred_check_branch
      %71 = sbr.rel (0) target = $region29
    $region28: #{network_with_priors_forward.1} parent=1 // pred_region
      %s73 = ssub.s32 8192, 8192
      %74 = vsyncadd [#allocation9], %s73
      %s75 = sshll.u32 [#allocation8], 4
      %s76 = int_to_ptr.vmem [resolvable:$true] %s75
      %81 = dma.hbm_to_vmem [thread:$0]  %s6, 8192, %s76, [#allocation9], 256, 256, 16
    $region29: #{network_with_priors_forward.1} parent=1 // pred_fallthru
      _
    // Predicated region
    $region30: #{network_with_priors_forward.1} parent=1 // pred_check
      _
    $region31: #{network_with_priors_forward.1} parent=1 // pred_check_branch
      %83 = sbr.rel (0) target = $region33
    $region32: #{network_with_priors_forward.1} parent=1 // pred_region
      _
    $region33: #{network_with_priors_forward.1} parent=1 // pred_fallthru
      _
    // Predicated region
    $region34: #{network_with_priors_forward.1} parent=1 // pred_check
      _
    $region35: #{network_with_priors_forward.1} parent=1 // pred_check_branch
      %85 = sbr.rel (0) target = $region37
    $region36: #{network_with_priors_forward.1} parent=1 // pred_region
      %s87 = ssub.s32 4096, 4096
      %88 = vsyncadd [#allocation9], %s87
      %s89 = sshll.u32 [#allocation10], 4
      %s90 = int_to_ptr.vmem [resolvable:$true] %s89
      %95 = dma.hbm_to_vmem [thread:$0]  %s8, 4096, %s90, [#allocation9], 128, 128, 8
    $region37: #{network_with_priors_forward.1} parent=1 // pred_fallthru
      _
    // Predicated region
    $region38: #{network_with_priors_forward.1} parent=1 // pred_check
      _
    $region39: #{network_with_priors_forward.1} parent=1 // pred_check_branch
      %97 = sbr.rel (0) target = $region41
    $region40: #{network_with_priors_forward.1} parent=1 // pred_region
      _
    $region41: #{network_with_priors_forward.1} parent=1 // pred_fallthru
      _
    // Predicated region
    $region42: #{network_with_priors_forward.1} parent=1 // pred_check
      _
    $region43: #{network_with_priors_forward.1} parent=1 // pred_check_branch
      %99 = sbr.rel (0) target = $region45
    $region44: #{network_with_priors_forward.1} parent=1 // pred_region
      %s101 = ssub.s32 1024, 1024
      %102 = vsyncadd [#allocation12], %s101
      %s103 = sshll.u32 [#allocation11], 4
      %s104 = int_to_ptr.vmem [resolvable:$true] %s103
      %109 = dma.hbm_to_vmem [thread:$0]  %s10, 1024, %s104, [#allocation12], 128, 128, 8
    $region45: #{network_with_priors_forward.1} parent=1 // pred_fallthru
      _
    // Predicated region
    $region46: #{network_with_priors_forward.1} parent=1 // pred_check
      _
    $region47: #{network_with_priors_forward.1} parent=1 // pred_check_branch
      %111 = sbr.rel (0) target = $region49
    $region48: #{network_with_priors_forward.1} parent=1 // pred_region
      _
    $region49: #{network_with_priors_forward.1} parent=1 // pred_fallthru
      _
    // Predicated region
    $region50: #{network_with_priors_forward.1} parent=1 // pred_check
      _
    $region51: #{network_with_priors_forward.1} parent=1 // pred_check_branch
      %113 = sbr.rel (0) target = $region53
    $region52: #{network_with_priors_forward.1} parent=1 // pred_region
      _
    $region53: #{network_with_priors_forward.1} parent=1 // pred_fallthru
      _
    // Predicated region
    $region54: #{network_with_priors_forward.1} parent=1 // pred_check
      _
    $region55: #{network_with_priors_forward.1} parent=1 // pred_check_branch
      %115 = sbr.rel (0) target = $region57
    $region56: #{network_with_priors_forward.1} parent=1 // pred_region
      %s117 = ssub.s32 8192, 8192
      %118 = vsyncadd [#allocation12], %s117
      %s119 = sshll.u32 [#allocation13], 4
      %s120 = int_to_ptr.vmem [resolvable:$true] %s119
      %125 = dma.hbm_to_vmem [thread:$0]  %s13, 8192, %s120, [#allocation12], 128, 128, 8
    $region57: #{network_with_priors_forward.1} parent=1 // pred_fallthru
      _
    // Predicated region
    $region58: #{network_with_priors_forward.1} parent=1 // pred_check
      _
    $region59: #{network_with_priors_forward.1} parent=1 // pred_check_branch
      %127 = sbr.rel (0) target = $region61
    $region60: #{network_with_priors_forward.1} parent=1 // pred_region
      _
    $region61: #{network_with_priors_forward.1} parent=1 // pred_fallthru
      _
    // Predicated region
    $region62: #{network_with_priors_forward.1} parent=1 // pred_check
      _
    $region63: #{network_with_priors_forward.1} parent=1 // pred_check_branch
      %129 = sbr.rel (0) target = $region65
    $region64: #{network_with_priors_forward.1} parent=1 // pred_region
      _
    $region65: #{network_with_priors_forward.1} parent=1 // pred_fallthru
      _
    // Predicated region
    $region66: #{network_with_priors_forward.1} parent=1 // pred_check
      _
    $region67: #{network_with_priors_forward.1} parent=1 // pred_check_branch
      %131 = sbr.rel (0) target = $region69
    $region68: #{network_with_priors_forward.1} parent=1 // pred_region
      _
    $region69: #{network_with_priors_forward.1} parent=1 // pred_fallthru
      _
    // Predicated region
    $region70: #{network_with_priors_forward.1} parent=1 // pred_check
      _
    $region71: #{network_with_priors_forward.1} parent=1 // pred_check_branch
      %133 = sbr.rel (0) target = $region73
    $region72: #{network_with_priors_forward.1} parent=1 // pred_region
      %s135 = ssub.s32 2048, 2048
      %136 = vsyncadd [#allocation15], %s135
      %s137 = sshll.u32 [#allocation14], 4
      %s138 = int_to_ptr.vmem [resolvable:$true] %s137
      %143 = dma.hbm_to_vmem [thread:$0]  %s17, 2048, %s138, [#allocation15], 128, 128, 8
    $region73: #{network_with_priors_forward.1} parent=1 // pred_fallthru
      _
    // Predicated region
    $region74: #{network_with_priors_forward.1} parent=1 // pred_check
      _
    $region75: #{network_with_priors_forward.1} parent=1 // pred_check_branch
      %145 = sbr.rel (0) target = $region77
    $region76: #{network_with_priors_forward.1} parent=1 // pred_region
      _
    $region77: #{network_with_priors_forward.1} parent=1 // pred_fallthru
      _
    // Predicated region
    $region78: #{network_with_priors_forward.1} parent=1 // pred_check
      _
    $region79: #{network_with_priors_forward.1} parent=1 // pred_check_branch
      %147 = sbr.rel (0) target = $region81
    $region80: #{network_with_priors_forward.1} parent=1 // pred_region
      %148 = dma.done [#allocation3], 128
    $region81: #{network_with_priors_forward.1} parent=1 // pred_fallthru
      _
    // Predicated region
    $region82: #{network_with_priors_forward.1} parent=1 // pred_check
      _
    $region83: #{network_with_priors_forward.1} parent=1 // pred_check_branch
      %150 = sbr.rel (0) target = $region85
    $region84: #{network_with_priors_forward.1} parent=1 // pred_region
      %151 = dma.done [#allocation6], 2048
    $region85: #{network_with_priors_forward.1} parent=1 // pred_fallthru
      _
    // Predicated region
    $region86: #{network_with_priors_forward.1} parent=1 // pred_check
      _
    $region87: #{network_with_priors_forward.1} parent=1 // pred_check_branch
      %153 = sbr.rel (0) target = $region89
    $region88: #{network_with_priors_forward.1} parent=1 // pred_region
      %154 = dma.done [#allocation6], 8192
    $region89: #{network_with_priors_forward.1} parent=1 // pred_fallthru
      _
    // Predicated region
    $region90: #{network_with_priors_forward.1} parent=1 // pred_check
      _
    $region91: #{network_with_priors_forward.1} parent=1 // pred_check_branch
      %156 = sbr.rel (0) target = $region93
    $region92: #{network_with_priors_forward.1} parent=1 // pred_region
      %157 = dma.done [#allocation9], 8192
    $region93: #{network_with_priors_forward.1} parent=1 // pred_fallthru
      _
    // Predicated region
    $region94: #{network_with_priors_forward.1} parent=1 // pred_check
      _
    $region95: #{network_with_priors_forward.1} parent=1 // pred_check_branch
      %159 = sbr.rel (0) target = $region97
    $region96: #{network_with_priors_forward.1} parent=1 // pred_region
      %160 = dma.done [#allocation9], 4096
    $region97: #{network_with_priors_forward.1} parent=1 // pred_fallthru
      _
    // Predicated region
    $region98: #{network_with_priors_forward.1} parent=1 // pred_check
      _
    $region99: #{network_with_priors_forward.1} parent=1 // pred_check_branch
      %162 = sbr.rel (0) target = $region101
    $region100: #{network_with_priors_forward.1} parent=1 // pred_region
      %163 = dma.done [#allocation12], 1024
    $region101: #{network_with_priors_forward.1} parent=1 // pred_fallthru
      _
    // Predicated region
    $region102: #{network_with_priors_forward.1} parent=1 // pred_check
      _
    $region103: #{network_with_priors_forward.1} parent=1 // pred_check_branch
      %165 = sbr.rel (0) target = $region105
    $region104: #{network_with_priors_forward.1} parent=1 // pred_region
      %166 = dma.done [#allocation12], 8192
    $region105: #{network_with_priors_forward.1} parent=1 // pred_fallthru
      _
    // Predicated region
    $region106: #{network_with_priors_forward.1} parent=1 // pred_check
      _
    $region107: #{network_with_priors_forward.1} parent=1 // pred_check_branch
      %168 = sbr.rel (0) target = $region109
    $region108: #{network_with_priors_forward.1} parent=1 // pred_region
      %169 = dma.done [#allocation15], 2048
    $region109: #{network_with_priors_forward.1} parent=1 // pred_fallthru
      _
    %v170 = vld [vmem:[%s0] sm:$0xff]
    %v171 = vld [vmem:[#allocation5] sm:$0xff]
    %v172 = vld [vmem:[#allocation5 + $0x8] sm:$0xff]
    %v173 = vld [vmem:[#allocation5 + $0x10] sm:$0xff]
    %v174 = vld [vmem:[#allocation5 + $0x18] sm:$0xff]
    %v175 = vld [vmem:[#allocation5 + $0x20] sm:$0xff]
    %v176 = vld [vmem:[#allocation5 + $0x28] sm:$0xff]
    %v177 = vld [vmem:[#allocation5 + $0x30] sm:$0xff]
    %v178 = vld [vmem:[#allocation5 + $0x38] sm:$0xff]
    %v179 = vld [vmem:[#allocation5 + $0x40] sm:$0xff]
    %v180 = vld [vmem:[#allocation5 + $0x48] sm:$0xff]
    %v181 = vld [vmem:[#allocation5 + $0x50] sm:$0xff]
    %v182 = vld [vmem:[#allocation5 + $0x58] sm:$0xff]
    %v183 = vld [vmem:[#allocation5 + $0x60] sm:$0xff]
    %v184 = vld [vmem:[#allocation5 + $0x68] sm:$0xff]
    %v185 = vld [vmem:[#allocation5 + $0x70] sm:$0xff]
    %v186 = vld [vmem:[#allocation5 + $0x78] sm:$0xff]
    %v187 = vld [vmem:[%s3] sm:$0x3]
    %v189 = vlaneseq
    %v190 = vshrl.u32 %v189, 7
    %v191 = vsub.s32 0, %v190
    %v192 = vrot.slane %v187, %v191
    %v193 = vlaneseq
    %v194 = vshrl.u32 %v193, 7
    %v195 = vsub.s32 1, %v194
    %v196 = vrot.slane %v187, %v195
    %vm199 = vcmask 523264
    %v201 = vsel %vm199, %v170, 0
    %203 = vmatprep.subr.mxu0 %v172
    %204 = vmatpush1.msra.mxu0 %v171
    %205 = vmatprep.subr.mxu0 %v174
    %206 = vmatpush1.msra.mxu0 %v173
    %207 = vmatprep.subr.mxu0 %v176
    %208 = vmatpush1.msra.mxu0 %v175
    %209 = vmatprep.subr.mxu0 %v178
    %210 = vmatpush1.msra.mxu0 %v177
    %211 = vmatprep.subr.mxu0 %v180
    %212 = vmatpush1.msra.mxu0 %v179
    %213 = vmatprep.subr.mxu0 %v182
    %214 = vmatpush1.msra.mxu0 %v181
    %215 = vmatprep.subr.mxu0 %v184
    %216 = vmatpush1.msra.mxu0 %v183
    %217 = vmatprep.subr.mxu0 %v186
    %218 = vmatpush1.msra.mxu0 %v185
    %219 = vmatprep.subr.mxu0 0.0
    %220 = vmatpush1.msra.mxu0 0.0
    %221 = vmatprep.subr.mxu0 0.0
    %222 = vmatpush1.msra.mxu0 0.0
    %223 = vmatprep.subr.mxu0 0.0
    %224 = vmatpush1.msra.mxu0 0.0
    %225 = vmatprep.subr.mxu0 0.0
    %226 = vmatpush1.msra.mxu0 0.0
    %227 = vmatprep.subr.mxu0 0.0
    %228 = vmatpush1.msra.mxu0 0.0
    %229 = vmatprep.subr.mxu0 0.0
    %230 = vmatpush1.msra.mxu0 0.0
    %231 = vmatprep.subr.mxu0 0.0
    %232 = vmatpush1.msra.mxu0 0.0
    %233 = vmatprep.subr.mxu0 0.0
    %234 = vmatpush1.msra.mxu0 0.0
    %235 = vmatprep.subr.mxu0 0.0
    %236 = vmatpush1.msra.mxu0 0.0
    %237 = vmatprep.subr.mxu0 0.0
    %238 = vmatpush1.msra.mxu0 0.0
    %239 = vmatprep.subr.mxu0 0.0
    %240 = vmatpush1.msra.mxu0 0.0
    %241 = vmatprep.subr.mxu0 0.0
    %242 = vmatpush1.msra.mxu0 0.0
    %243 = vmatprep.subr.mxu0 0.0
    %244 = vmatpush1.msra.mxu0 0.0
    %245 = vmatprep.subr.mxu0 0.0
    %246 = vmatpush1.msra.mxu0 0.0
    %247 = vmatprep.subr.mxu0 0.0
    %248 = vmatpush1.msra.mxu0 0.0
    %249 = vmatprep.subr.mxu0 0.0
    %250 = vmatpush1.msra.mxu0 0.0
    %251 = vmatprep.subr.mxu0 0.0
    %252 = vmatpush1.msra.mxu0 0.0
    %253 = vmatprep.subr.mxu0 0.0
    %254 = vmatpush1.msra.mxu0 0.0
    %255 = vmatprep.subr.mxu0 0.0
    %256 = vmatpush1.msra.mxu0 0.0
    %257 = vmatprep.subr.mxu0 0.0
    %258 = vmatpush1.msra.mxu0 0.0
    %259 = vmatprep.subr.mxu0 0.0
    %260 = vmatpush1.msra.mxu0 0.0
    %261 = vmatprep.subr.mxu0 0.0
    %262 = vmatpush1.msra.mxu0 0.0
    %263 = vmatprep.subr.mxu0 0.0
    %264 = vmatpush1.msra.mxu0 0.0
    %265 = vmatprep.subr.mxu0 0.0
    %266 = vmatpush1.msra.mxu0 0.0
    %267 = vmatprep.mubr.f32.mxu0 0.0
    %268 = vmatmul.mubr.f32.gmra.mrb[0].mxu0 %v201
    %v269 = vpop.f32.mrb[0].mxu0
    %v270 = vadd.f32 %v192, %v269
    %v271 = vpop.f32.mrb[0].mxu0
    %v272 = vadd.f32 %v196, %v271
    %273 = vdwg.mxu0
    %v274 = vmul.f32 %v270, %v270
    %v275 = vmul.f32 %v272, %v272
    %v276 = vmul.f32 %v270, %v274
    %v277 = vmul.f32 %v272, %v275
    %v278 = vmul.f32 %v276, 0.044715
    %v279 = vmul.f32 %v277, 0.044715
    %v280 = vadd.f32 %v270, %v278
    %v281 = vadd.f32 %v272, %v279
    %v282 = vmul.f32 %v280, 0.7978846
    %v283 = vmul.f32 %v281, 0.7978846
    %v284 = vtanh.pop %v282
    %v285 = vtanh.pop %v283
    %v286 = vadd.f32 %v284, 1.0
    %v287 = vadd.f32 %v285, 1.0
    %v288 = vmul.f32 %v286, 0.5
    %v289 = vmul.f32 %v287, 0.5
    %v290 = vmul.f32 %v270, %v288
    %v291 = vmul.f32 %v272, %v289
    %v292 = vld [vmem:[#allocation7] sm:$0xff]
    %v293 = vld [vmem:[#allocation7 + $0x8] sm:$0xff]
    %v294 = vld [vmem:[#allocation7 + $0x10] sm:$0xff]
    %v295 = vld [vmem:[#allocation7 + $0x18] sm:$0xff]
    %v296 = vld [vmem:[#allocation7 + $0x20] sm:$0xff]
    %v297 = vld [vmem:[#allocation7 + $0x28] sm:$0xff]
    %v298 = vld [vmem:[#allocation7 + $0x30] sm:$0xff]
    %v299 = vld [vmem:[#allocation7 + $0x38] sm:$0xff]
    %v300 = vld [vmem:[#allocation7 + $0x40] sm:$0xff]
    %v301 = vld [vmem:[#allocation7 + $0x48] sm:$0xff]
    %v302 = vld [vmem:[#allocation7 + $0x50] sm:$0xff]
    %v303 = vld [vmem:[#allocation7 + $0x58] sm:$0xff]
    %v304 = vld [vmem:[#allocation7 + $0x60] sm:$0xff]
    %v305 = vld [vmem:[#allocation7 + $0x68] sm:$0xff]
    %v306 = vld [vmem:[#allocation7 + $0x70] sm:$0xff]
    %v307 = vld [vmem:[#allocation7 + $0x78] sm:$0xff]
    %v308 = vld [vmem:[#allocation7 + $0x80] sm:$0xff]
    %v309 = vld [vmem:[#allocation7 + $0x88] sm:$0xff]
    %v310 = vld [vmem:[#allocation7 + $0x90] sm:$0xff]
    %v311 = vld [vmem:[#allocation7 + $0x98] sm:$0xff]
    %v312 = vld [vmem:[#allocation7 + $0xa0] sm:$0xff]
    %v313 = vld [vmem:[#allocation7 + $0xa8] sm:$0xff]
    %v314 = vld [vmem:[#allocation7 + $0xb0] sm:$0xff]
    %v315 = vld [vmem:[#allocation7 + $0xb8] sm:$0xff]
    %v316 = vld [vmem:[#allocation7 + $0xc0] sm:$0xff]
    %v317 = vld [vmem:[#allocation7 + $0xc8] sm:$0xff]
    %v318 = vld [vmem:[#allocation7 + $0xd0] sm:$0xff]
    %v319 = vld [vmem:[#allocation7 + $0xd8] sm:$0xff]
    %v320 = vld [vmem:[#allocation7 + $0xe0] sm:$0xff]
    %v321 = vld [vmem:[#allocation7 + $0xe8] sm:$0xff]
    %v322 = vld [vmem:[#allocation7 + $0xf0] sm:$0xff]
    %v323 = vld [vmem:[#allocation7 + $0xf8] sm:$0xff]
    %v324 = vld [vmem:[#allocation7 + $0x100] sm:$0xff]
    %v325 = vld [vmem:[#allocation7 + $0x108] sm:$0xff]
    %v326 = vld [vmem:[#allocation7 + $0x110] sm:$0xff]
    %v327 = vld [vmem:[#allocation7 + $0x118] sm:$0xff]
    %v328 = vld [vmem:[#allocation7 + $0x120] sm:$0xff]
    %v329 = vld [vmem:[#allocation7 + $0x128] sm:$0xff]
    %v330 = vld [vmem:[#allocation7 + $0x130] sm:$0xff]
    %v331 = vld [vmem:[#allocation7 + $0x138] sm:$0xff]
    %v332 = vld [vmem:[#allocation7 + $0x140] sm:$0xff]
    %v333 = vld [vmem:[#allocation7 + $0x148] sm:$0xff]
    %v334 = vld [vmem:[#allocation7 + $0x150] sm:$0xff]
    %v335 = vld [vmem:[#allocation7 + $0x158] sm:$0xff]
    %v336 = vld [vmem:[#allocation7 + $0x160] sm:$0xff]
    %v337 = vld [vmem:[#allocation7 + $0x168] sm:$0xff]
    %v338 = vld [vmem:[#allocation7 + $0x170] sm:$0xff]
    %v339 = vld [vmem:[#allocation7 + $0x178] sm:$0xff]
    %v340 = vld [vmem:[#allocation7 + $0x180] sm:$0xff]
    %v341 = vld [vmem:[#allocation7 + $0x188] sm:$0xff]
    %v342 = vld [vmem:[#allocation7 + $0x190] sm:$0xff]
    %v343 = vld [vmem:[#allocation7 + $0x198] sm:$0xff]
    %v344 = vld [vmem:[#allocation7 + $0x1a0] sm:$0xff]
    %v345 = vld [vmem:[#allocation7 + $0x1a8] sm:$0xff]
    %v346 = vld [vmem:[#allocation7 + $0x1b0] sm:$0xff]
    %v347 = vld [vmem:[#allocation7 + $0x1b8] sm:$0xff]
    %v348 = vld [vmem:[#allocation7 + $0x1c0] sm:$0xff]
    %v349 = vld [vmem:[#allocation7 + $0x1c8] sm:$0xff]
    %v350 = vld [vmem:[#allocation7 + $0x1d0] sm:$0xff]
    %v351 = vld [vmem:[#allocation7 + $0x1d8] sm:$0xff]
    %v352 = vld [vmem:[#allocation7 + $0x1e0] sm:$0xff]
    %v353 = vld [vmem:[#allocation7 + $0x1e8] sm:$0xff]
    %v354 = vld [vmem:[#allocation7 + $0x1f0] sm:$0xff]
    %v355 = vld [vmem:[#allocation7 + $0x1f8] sm:$0xff]
    %v356 = vld [vmem:[%s5] sm:$0x3]
    %v358 = vlaneseq
    %v359 = vshrl.u32 %v358, 7
    %v360 = vsub.s32 0, %v359
    %v361 = vrot.slane %v356, %v360
    %v362 = vlaneseq
    %v363 = vshrl.u32 %v362, 7
    %v364 = vsub.s32 1, %v363
    %v365 = vrot.slane %v356, %v364
    %368 = vmatprep.subr.mxu0 %v293
    %369 = vmatpush1.msra.mxu0 %v292
    %370 = vmatprep.subr.mxu0 %v295
    %371 = vmatpush1.msra.mxu0 %v294
    %372 = vmatprep.subr.mxu0 %v297
    %373 = vmatpush1.msra.mxu0 %v296
    %374 = vmatprep.subr.mxu0 %v299
    %375 = vmatpush1.msra.mxu0 %v298
    %376 = vmatprep.subr.mxu0 %v301
    %377 = vmatpush1.msra.mxu0 %v300
    %378 = vmatprep.subr.mxu0 %v303
    %379 = vmatpush1.msra.mxu0 %v302
    %380 = vmatprep.subr.mxu0 %v305
    %381 = vmatpush1.msra.mxu0 %v304
    %382 = vmatprep.subr.mxu0 %v307
    %383 = vmatpush1.msra.mxu0 %v306
    %384 = vmatprep.subr.mxu0 %v309
    %385 = vmatpush1.msra.mxu0 %v308
    %386 = vmatprep.subr.mxu0 %v311
    %387 = vmatpush1.msra.mxu0 %v310
    %388 = vmatprep.subr.mxu0 %v313
    %389 = vmatpush1.msra.mxu0 %v312
    %390 = vmatprep.subr.mxu0 %v315
    %391 = vmatpush1.msra.mxu0 %v314
    %392 = vmatprep.subr.mxu0 %v317
    %393 = vmatpush1.msra.mxu0 %v316
    %394 = vmatprep.subr.mxu0 %v319
    %395 = vmatpush1.msra.mxu0 %v318
    %396 = vmatprep.subr.mxu0 %v321
    %397 = vmatpush1.msra.mxu0 %v320
    %398 = vmatprep.subr.mxu0 %v323
    %399 = vmatpush1.msra.mxu0 %v322
    %400 = vmatprep.subr.mxu0 %v325
    %401 = vmatpush1.msra.mxu0 %v324
    %402 = vmatprep.subr.mxu0 %v327
    %403 = vmatpush1.msra.mxu0 %v326
    %404 = vmatprep.subr.mxu0 %v329
    %405 = vmatpush1.msra.mxu0 %v328
    %406 = vmatprep.subr.mxu0 %v331
    %407 = vmatpush1.msra.mxu0 %v330
    %408 = vmatprep.subr.mxu0 %v333
    %409 = vmatpush1.msra.mxu0 %v332
    %410 = vmatprep.subr.mxu0 %v335
    %411 = vmatpush1.msra.mxu0 %v334
    %412 = vmatprep.subr.mxu0 %v337
    %413 = vmatpush1.msra.mxu0 %v336
    %414 = vmatprep.subr.mxu0 %v339
    %415 = vmatpush1.msra.mxu0 %v338
    %416 = vmatprep.subr.mxu0 %v341
    %417 = vmatpush1.msra.mxu0 %v340
    %418 = vmatprep.subr.mxu0 %v343
    %419 = vmatpush1.msra.mxu0 %v342
    %420 = vmatprep.subr.mxu0 %v345
    %421 = vmatpush1.msra.mxu0 %v344
    %422 = vmatprep.subr.mxu0 %v347
    %423 = vmatpush1.msra.mxu0 %v346
    %424 = vmatprep.subr.mxu0 %v349
    %425 = vmatpush1.msra.mxu0 %v348
    %426 = vmatprep.subr.mxu0 %v351
    %427 = vmatpush1.msra.mxu0 %v350
    %428 = vmatprep.subr.mxu0 %v353
    %429 = vmatpush1.msra.mxu0 %v352
    %430 = vmatprep.subr.mxu0 %v355
    %431 = vmatpush1.msra.mxu0 %v354
    %432 = vmatprep.mubr.f32.mxu0 %v291
    %433 = vmatmul.mubr.f32.gmra.mrb[0].mxu0 %v290
    %v434 = vpop.f32.mrb[0].mxu0
    %v435 = vadd.f32 %v361, %v434
    %v436 = vpop.f32.mrb[0].mxu0
    %v437 = vadd.f32 %v365, %v436
    %438 = vdwg.mxu0
    %v439 = vmul.f32 %v435, %v435
    %v440 = vmul.f32 %v437, %v437
    %v441 = vmul.f32 %v435, %v439
    %v442 = vmul.f32 %v437, %v440
    %v443 = vmul.f32 %v441, 0.044715
    %v444 = vmul.f32 %v442, 0.044715
    %v445 = vadd.f32 %v435, %v443
    %v446 = vadd.f32 %v437, %v444
    %v447 = vmul.f32 %v445, 0.7978846
    %v448 = vmul.f32 %v446, 0.7978846
    %v449 = vtanh.pop %v447
    %v450 = vtanh.pop %v448
    %v451 = vadd.f32 %v449, 1.0
    %v452 = vadd.f32 %v450, 1.0
    %v453 = vmul.f32 %v451, 0.5
    %v454 = vmul.f32 %v452, 0.5
    %v455 = vmul.f32 %v435, %v453
    %v456 = vmul.f32 %v437, %v454
    %v457 = vld [vmem:[#allocation8] sm:$0xff]
    %v458 = vld [vmem:[#allocation8 + $0x8] sm:$0xff]
    %v459 = vld [vmem:[#allocation8 + $0x10] sm:$0xff]
    %v460 = vld [vmem:[#allocation8 + $0x18] sm:$0xff]
    %v461 = vld [vmem:[#allocation8 + $0x20] sm:$0xff]
    %v462 = vld [vmem:[#allocation8 + $0x28] sm:$0xff]
    %v463 = vld [vmem:[#allocation8 + $0x30] sm:$0xff]
    %v464 = vld [vmem:[#allocation8 + $0x38] sm:$0xff]
    %v465 = vld [vmem:[#allocation8 + $0x40] sm:$0xff]
    %v466 = vld [vmem:[#allocation8 + $0x48] sm:$0xff]
    %v467 = vld [vmem:[#allocation8 + $0x50] sm:$0xff]
    %v468 = vld [vmem:[#allocation8 + $0x58] sm:$0xff]
    %v469 = vld [vmem:[#allocation8 + $0x60] sm:$0xff]
    %v470 = vld [vmem:[#allocation8 + $0x68] sm:$0xff]
    %v471 = vld [vmem:[#allocation8 + $0x70] sm:$0xff]
    %v472 = vld [vmem:[#allocation8 + $0x78] sm:$0xff]
    %v473 = vld [vmem:[#allocation8 + $0x80] sm:$0xff]
    %v474 = vld [vmem:[#allocation8 + $0x88] sm:$0xff]
    %v475 = vld [vmem:[#allocation8 + $0x90] sm:$0xff]
    %v476 = vld [vmem:[#allocation8 + $0x98] sm:$0xff]
    %v477 = vld [vmem:[#allocation8 + $0xa0] sm:$0xff]
    %v478 = vld [vmem:[#allocation8 + $0xa8] sm:$0xff]
    %v479 = vld [vmem:[#allocation8 + $0xb0] sm:$0xff]
    %v480 = vld [vmem:[#allocation8 + $0xb8] sm:$0xff]
    %v481 = vld [vmem:[#allocation8 + $0xc0] sm:$0xff]
    %v482 = vld [vmem:[#allocation8 + $0xc8] sm:$0xff]
    %v483 = vld [vmem:[#allocation8 + $0xd0] sm:$0xff]
    %v484 = vld [vmem:[#allocation8 + $0xd8] sm:$0xff]
    %v485 = vld [vmem:[#allocation8 + $0xe0] sm:$0xff]
    %v486 = vld [vmem:[#allocation8 + $0xe8] sm:$0xff]
    %v487 = vld [vmem:[#allocation8 + $0xf0] sm:$0xff]
    %v488 = vld [vmem:[#allocation8 + $0xf8] sm:$0xff]
    %v489 = vld [vmem:[#allocation8 + $0x100] sm:$0xff]
    %v490 = vld [vmem:[#allocation8 + $0x108] sm:$0xff]
    %v491 = vld [vmem:[#allocation8 + $0x110] sm:$0xff]
    %v492 = vld [vmem:[#allocation8 + $0x118] sm:$0xff]
    %v493 = vld [vmem:[#allocation8 + $0x120] sm:$0xff]
    %v494 = vld [vmem:[#allocation8 + $0x128] sm:$0xff]
    %v495 = vld [vmem:[#allocation8 + $0x130] sm:$0xff]
    %v496 = vld [vmem:[#allocation8 + $0x138] sm:$0xff]
    %v497 = vld [vmem:[#allocation8 + $0x140] sm:$0xff]
    %v498 = vld [vmem:[#allocation8 + $0x148] sm:$0xff]
    %v499 = vld [vmem:[#allocation8 + $0x150] sm:$0xff]
    %v500 = vld [vmem:[#allocation8 + $0x158] sm:$0xff]
    %v501 = vld [vmem:[#allocation8 + $0x160] sm:$0xff]
    %v502 = vld [vmem:[#allocation8 + $0x168] sm:$0xff]
    %v503 = vld [vmem:[#allocation8 + $0x170] sm:$0xff]
    %v504 = vld [vmem:[#allocation8 + $0x178] sm:$0xff]
    %v505 = vld [vmem:[#allocation8 + $0x180] sm:$0xff]
    %v506 = vld [vmem:[#allocation8 + $0x188] sm:$0xff]
    %v507 = vld [vmem:[#allocation8 + $0x190] sm:$0xff]
    %v508 = vld [vmem:[#allocation8 + $0x198] sm:$0xff]
    %v509 = vld [vmem:[#allocation8 + $0x1a0] sm:$0xff]
    %v510 = vld [vmem:[#allocation8 + $0x1a8] sm:$0xff]
    %v511 = vld [vmem:[#allocation8 + $0x1b0] sm:$0xff]
    %v512 = vld [vmem:[#allocation8 + $0x1b8] sm:$0xff]
    %v513 = vld [vmem:[#allocation8 + $0x1c0] sm:$0xff]
    %v514 = vld [vmem:[#allocation8 + $0x1c8] sm:$0xff]
    %v515 = vld [vmem:[#allocation8 + $0x1d0] sm:$0xff]
    %v516 = vld [vmem:[#allocation8 + $0x1d8] sm:$0xff]
    %v517 = vld [vmem:[#allocation8 + $0x1e0] sm:$0xff]
    %v518 = vld [vmem:[#allocation8 + $0x1e8] sm:$0xff]
    %v519 = vld [vmem:[#allocation8 + $0x1f0] sm:$0xff]
    %v520 = vld [vmem:[#allocation8 + $0x1f8] sm:$0xff]
    %v521 = vld [vmem:[%s7] sm:$0x3]
    %v523 = vlaneseq
    %v524 = vshrl.u32 %v523, 7
    %v525 = vsub.s32 0, %v524
    %v526 = vrot.slane %v521, %v525
    %v527 = vlaneseq
    %v528 = vshrl.u32 %v527, 7
    %v529 = vsub.s32 1, %v528
    %v530 = vrot.slane %v521, %v529
    %533 = vmatprep.subr.mxu0 %v458
    %534 = vmatpush1.msra.mxu0 %v457
    %535 = vmatprep.subr.mxu0 %v460
    %536 = vmatpush1.msra.mxu0 %v459
    %537 = vmatprep.subr.mxu0 %v462
    %538 = vmatpush1.msra.mxu0 %v461
    %539 = vmatprep.subr.mxu0 %v464
    %540 = vmatpush1.msra.mxu0 %v463
    %541 = vmatprep.subr.mxu0 %v466
    %542 = vmatpush1.msra.mxu0 %v465
    %543 = vmatprep.subr.mxu0 %v468
    %544 = vmatpush1.msra.mxu0 %v467
    %545 = vmatprep.subr.mxu0 %v470
    %546 = vmatpush1.msra.mxu0 %v469
    %547 = vmatprep.subr.mxu0 %v472
    %548 = vmatpush1.msra.mxu0 %v471
    %549 = vmatprep.subr.mxu0 %v474
    %550 = vmatpush1.msra.mxu0 %v473
    %551 = vmatprep.subr.mxu0 %v476
    %552 = vmatpush1.msra.mxu0 %v475
    %553 = vmatprep.subr.mxu0 %v478
    %554 = vmatpush1.msra.mxu0 %v477
    %555 = vmatprep.subr.mxu0 %v480
    %556 = vmatpush1.msra.mxu0 %v479
    %557 = vmatprep.subr.mxu0 %v482
    %558 = vmatpush1.msra.mxu0 %v481
    %559 = vmatprep.subr.mxu0 %v484
    %560 = vmatpush1.msra.mxu0 %v483
    %561 = vmatprep.subr.mxu0 %v486
    %562 = vmatpush1.msra.mxu0 %v485
    %563 = vmatprep.subr.mxu0 %v488
    %564 = vmatpush1.msra.mxu0 %v487
    %565 = vmatprep.subr.mxu0 %v490
    %566 = vmatpush1.msra.mxu0 %v489
    %567 = vmatprep.subr.mxu0 %v492
    %568 = vmatpush1.msra.mxu0 %v491
    %569 = vmatprep.subr.mxu0 %v494
    %570 = vmatpush1.msra.mxu0 %v493
    %571 = vmatprep.subr.mxu0 %v496
    %572 = vmatpush1.msra.mxu0 %v495
    %573 = vmatprep.subr.mxu0 %v498
    %574 = vmatpush1.msra.mxu0 %v497
    %575 = vmatprep.subr.mxu0 %v500
    %576 = vmatpush1.msra.mxu0 %v499
    %577 = vmatprep.subr.mxu0 %v502
    %578 = vmatpush1.msra.mxu0 %v501
    %579 = vmatprep.subr.mxu0 %v504
    %580 = vmatpush1.msra.mxu0 %v503
    %581 = vmatprep.subr.mxu0 %v506
    %582 = vmatpush1.msra.mxu0 %v505
    %583 = vmatprep.subr.mxu0 %v508
    %584 = vmatpush1.msra.mxu0 %v507
    %585 = vmatprep.subr.mxu0 %v510
    %586 = vmatpush1.msra.mxu0 %v509
    %587 = vmatprep.subr.mxu0 %v512
    %588 = vmatpush1.msra.mxu0 %v511
    %589 = vmatprep.subr.mxu0 %v514
    %590 = vmatpush1.msra.mxu0 %v513
    %591 = vmatprep.subr.mxu0 %v516
    %592 = vmatpush1.msra.mxu0 %v515
    %593 = vmatprep.subr.mxu0 %v518
    %594 = vmatpush1.msra.mxu0 %v517
    %595 = vmatprep.subr.mxu0 %v520
    %596 = vmatpush1.msra.mxu0 %v519
    %597 = vmatprep.mubr.f32.mxu0 %v456
    %598 = vmatmul.mubr.f32.gmra.mrb[0].mxu0 %v455
    %v599 = vpop.f32.mrb[0].mxu0
    %v600 = vadd.f32 %v526, %v599
    %v601 = vpop.f32.mrb[0].mxu0
    %v602 = vadd.f32 %v530, %v601
    %603 = vdwg.mxu0
    %v604 = vmul.f32 %v600, %v600
    %v605 = vmul.f32 %v602, %v602
    %v606 = vmul.f32 %v600, %v604
    %v607 = vmul.f32 %v602, %v605
    %v608 = vmul.f32 %v606, 0.044715
    %v609 = vmul.f32 %v607, 0.044715
    %v610 = vadd.f32 %v600, %v608
    %v611 = vadd.f32 %v602, %v609
    %v612 = vmul.f32 %v610, 0.7978846
    %v613 = vmul.f32 %v611, 0.7978846
    %v614 = vtanh.pop %v612
    %v615 = vtanh.pop %v613
    %v616 = vadd.f32 %v614, 1.0
    %v617 = vadd.f32 %v615, 1.0
    %v618 = vmul.f32 %v616, 0.5
    %v619 = vmul.f32 %v617, 0.5
    %v620 = vmul.f32 %v600, %v618
    %v621 = vmul.f32 %v602, %v619
    %v622 = vld [vmem:[#allocation10] sm:$0xff]
    %v623 = vld [vmem:[#allocation10 + $0x8] sm:$0xff]
    %v624 = vld [vmem:[#allocation10 + $0x10] sm:$0xff]
    %v625 = vld [vmem:[#allocation10 + $0x18] sm:$0xff]
    %v626 = vld [vmem:[#allocation10 + $0x20] sm:$0xff]
    %v627 = vld [vmem:[#allocation10 + $0x28] sm:$0xff]
    %v628 = vld [vmem:[#allocation10 + $0x30] sm:$0xff]
    %v629 = vld [vmem:[#allocation10 + $0x38] sm:$0xff]
    %v630 = vld [vmem:[#allocation10 + $0x40] sm:$0xff]
    %v631 = vld [vmem:[#allocation10 + $0x48] sm:$0xff]
    %v632 = vld [vmem:[#allocation10 + $0x50] sm:$0xff]
    %v633 = vld [vmem:[#allocation10 + $0x58] sm:$0xff]
    %v634 = vld [vmem:[#allocation10 + $0x60] sm:$0xff]
    %v635 = vld [vmem:[#allocation10 + $0x68] sm:$0xff]
    %v636 = vld [vmem:[#allocation10 + $0x70] sm:$0xff]
    %v637 = vld [vmem:[#allocation10 + $0x78] sm:$0xff]
    %v638 = vld [vmem:[#allocation10 + $0x80] sm:$0xff]
    %v639 = vld [vmem:[#allocation10 + $0x88] sm:$0xff]
    %v640 = vld [vmem:[#allocation10 + $0x90] sm:$0xff]
    %v641 = vld [vmem:[#allocation10 + $0x98] sm:$0xff]
    %v642 = vld [vmem:[#allocation10 + $0xa0] sm:$0xff]
    %v643 = vld [vmem:[#allocation10 + $0xa8] sm:$0xff]
    %v644 = vld [vmem:[#allocation10 + $0xb0] sm:$0xff]
    %v645 = vld [vmem:[#allocation10 + $0xb8] sm:$0xff]
    %v646 = vld [vmem:[#allocation10 + $0xc0] sm:$0xff]
    %v647 = vld [vmem:[#allocation10 + $0xc8] sm:$0xff]
    %v648 = vld [vmem:[#allocation10 + $0xd0] sm:$0xff]
    %v649 = vld [vmem:[#allocation10 + $0xd8] sm:$0xff]
    %v650 = vld [vmem:[#allocation10 + $0xe0] sm:$0xff]
    %v651 = vld [vmem:[#allocation10 + $0xe8] sm:$0xff]
    %v652 = vld [vmem:[#allocation10 + $0xf0] sm:$0xff]
    %v653 = vld [vmem:[#allocation10 + $0xf8] sm:$0xff]
    %v654 = vld [vmem:[%s9] sm:$0x1]
    %v656 = vlaneseq
    %v657 = vshrl.u32 %v656, 7
    %v658 = vsub.s32 0, %v657
    %v659 = vrot.slane %v654, %v658
    %661 = vmatprep.subr.mxu0 0.0
    %662 = vmatpush1.msra.mxu0 %v622
    %663 = vmatprep.subr.mxu0 0.0
    %664 = vmatpush1.msra.mxu0 %v623
    %665 = vmatprep.subr.mxu0 0.0
    %666 = vmatpush1.msra.mxu0 %v624
    %667 = vmatprep.subr.mxu0 0.0
    %668 = vmatpush1.msra.mxu0 %v625
    %669 = vmatprep.subr.mxu0 0.0
    %670 = vmatpush1.msra.mxu0 %v626
    %671 = vmatprep.subr.mxu0 0.0
    %672 = vmatpush1.msra.mxu0 %v627
    %673 = vmatprep.subr.mxu0 0.0
    %674 = vmatpush1.msra.mxu0 %v628
    %675 = vmatprep.subr.mxu0 0.0
    %676 = vmatpush1.msra.mxu0 %v629
    %677 = vmatprep.subr.mxu0 0.0
    %678 = vmatpush1.msra.mxu0 %v630
    %679 = vmatprep.subr.mxu0 0.0
    %680 = vmatpush1.msra.mxu0 %v631
    %681 = vmatprep.subr.mxu0 0.0
    %682 = vmatpush1.msra.mxu0 %v632
    %683 = vmatprep.subr.mxu0 0.0
    %684 = vmatpush1.msra.mxu0 %v633
    %685 = vmatprep.subr.mxu0 0.0
    %686 = vmatpush1.msra.mxu0 %v634
    %687 = vmatprep.subr.mxu0 0.0
    %688 = vmatpush1.msra.mxu0 %v635
    %689 = vmatprep.subr.mxu0 0.0
    %690 = vmatpush1.msra.mxu0 %v636
    %691 = vmatprep.subr.mxu0 0.0
    %692 = vmatpush1.msra.mxu0 %v637
    %693 = vmatprep.subr.mxu0 0.0
    %694 = vmatpush1.msra.mxu0 %v638
    %695 = vmatprep.subr.mxu0 0.0
    %696 = vmatpush1.msra.mxu0 %v639
    %697 = vmatprep.subr.mxu0 0.0
    %698 = vmatpush1.msra.mxu0 %v640
    %699 = vmatprep.subr.mxu0 0.0
    %700 = vmatpush1.msra.mxu0 %v641
    %701 = vmatprep.subr.mxu0 0.0
    %702 = vmatpush1.msra.mxu0 %v642
    %703 = vmatprep.subr.mxu0 0.0
    %704 = vmatpush1.msra.mxu0 %v643
    %705 = vmatprep.subr.mxu0 0.0
    %706 = vmatpush1.msra.mxu0 %v644
    %707 = vmatprep.subr.mxu0 0.0
    %708 = vmatpush1.msra.mxu0 %v645
    %709 = vmatprep.subr.mxu0 0.0
    %710 = vmatpush1.msra.mxu0 %v646
    %711 = vmatprep.subr.mxu0 0.0
    %712 = vmatpush1.msra.mxu0 %v647
    %713 = vmatprep.subr.mxu0 0.0
    %714 = vmatpush1.msra.mxu0 %v648
    %715 = vmatprep.subr.mxu0 0.0
    %716 = vmatpush1.msra.mxu0 %v649
    %717 = vmatprep.subr.mxu0 0.0
    %718 = vmatpush1.msra.mxu0 %v650
    %719 = vmatprep.subr.mxu0 0.0
    %720 = vmatpush1.msra.mxu0 %v651
    %721 = vmatprep.subr.mxu0 0.0
    %722 = vmatpush1.msra.mxu0 %v652
    %723 = vmatprep.subr.mxu0 0.0
    %724 = vmatpush1.msra.mxu0 %v653
    %725 = vmatprep.mubr.f32.mxu0 %v621
    %726 = vmatmul.mubr.f32.gmra.mrb[0].mxu0 %v620
    %v727 = vpop.f32.mrb[0].mxu0
    %v728 = vadd.f32 %v659, %v727
    %v729 = vpop.f32.mrb[0].mxu0
    %730 = vdwg.mxu0
    %v731 = vld [vmem:[#allocation11] sm:$0xff]
    %v732 = vld [vmem:[#allocation11 + $0x8] sm:$0xff]
    %v733 = vld [vmem:[#allocation11 + $0x10] sm:$0xff]
    %v734 = vld [vmem:[#allocation11 + $0x18] sm:$0xff]
    %v735 = vld [vmem:[#allocation11 + $0x20] sm:$0xff]
    %v736 = vld [vmem:[#allocation11 + $0x28] sm:$0xff]
    %v737 = vld [vmem:[#allocation11 + $0x30] sm:$0xff]
    %v738 = vld [vmem:[#allocation11 + $0x38] sm:$0xff]
    %v739 = vld [vmem:[#allocation2] sm:$0xff]
    %v740 = vld [vmem:[%s11] sm:$0xff]
    %v741 = vld [vmem:[%s11 + $0x8] sm:$0xff]
    %vm742 = vcmask 130048
    %v744 = vsel %vm742, %v739, 0
    %746 = vmatprep.subr.mxu0 0.0
    %747 = vmatpush1.msra.mxu0 %v740
    %748 = vmatprep.subr.mxu0 0.0
    %749 = vmatpush1.msra.mxu0 %v741
    %750 = vmatprep.subr.mxu0 0.0
    %751 = vmatpush1.msra.mxu0 0.0
    %752 = vmatprep.subr.mxu0 0.0
    %753 = vmatpush1.msra.mxu0 0.0
    %754 = vmatprep.subr.mxu0 0.0
    %755 = vmatpush1.msra.mxu0 0.0
    %756 = vmatprep.subr.mxu0 0.0
    %757 = vmatpush1.msra.mxu0 0.0
    %758 = vmatprep.subr.mxu0 0.0
    %759 = vmatpush1.msra.mxu0 0.0
    %760 = vmatprep.subr.mxu0 0.0
    %761 = vmatpush1.msra.mxu0 0.0
    %762 = vmatprep.subr.mxu0 0.0
    %763 = vmatpush1.msra.mxu0 0.0
    %764 = vmatprep.subr.mxu0 0.0
    %765 = vmatpush1.msra.mxu0 0.0
    %766 = vmatprep.subr.mxu0 0.0
    %767 = vmatpush1.msra.mxu0 0.0
    %768 = vmatprep.subr.mxu0 0.0
    %769 = vmatpush1.msra.mxu0 0.0
    %770 = vmatprep.subr.mxu0 0.0
    %771 = vmatpush1.msra.mxu0 0.0
    %772 = vmatprep.subr.mxu0 0.0
    %773 = vmatpush1.msra.mxu0 0.0
    %774 = vmatprep.subr.mxu0 0.0
    %775 = vmatpush1.msra.mxu0 0.0
    %776 = vmatprep.subr.mxu0 0.0
    %777 = vmatpush1.msra.mxu0 0.0
    %778 = vmatprep.subr.mxu0 0.0
    %779 = vmatpush1.msra.mxu0 0.0
    %780 = vmatprep.subr.mxu0 0.0
    %781 = vmatpush1.msra.mxu0 0.0
    %782 = vmatprep.subr.mxu0 0.0
    %783 = vmatpush1.msra.mxu0 0.0
    %784 = vmatprep.subr.mxu0 0.0
    %785 = vmatpush1.msra.mxu0 0.0
    %786 = vmatprep.subr.mxu0 0.0
    %787 = vmatpush1.msra.mxu0 0.0
    %788 = vmatprep.subr.mxu0 0.0
    %789 = vmatpush1.msra.mxu0 0.0
    %790 = vmatprep.subr.mxu0 0.0
    %791 = vmatpush1.msra.mxu0 0.0
    %792 = vmatprep.subr.mxu0 0.0
    %793 = vmatpush1.msra.mxu0 0.0
    %794 = vmatprep.subr.mxu0 0.0
    %795 = vmatpush1.msra.mxu0 0.0
    %796 = vmatprep.subr.mxu0 0.0
    %797 = vmatpush1.msra.mxu0 0.0
    %798 = vmatprep.subr.mxu0 0.0
    %799 = vmatpush1.msra.mxu0 0.0
    %800 = vmatprep.subr.mxu0 0.0
    %801 = vmatpush1.msra.mxu0 0.0
    %802 = vmatprep.subr.mxu0 0.0
    %803 = vmatpush1.msra.mxu0 0.0
    %804 = vmatprep.subr.mxu0 0.0
    %805 = vmatpush1.msra.mxu0 0.0
    %806 = vmatprep.subr.mxu0 0.0
    %807 = vmatpush1.msra.mxu0 0.0
    %808 = vmatprep.subr.mxu0 0.0
    %809 = vmatpush1.msra.mxu0 0.0
    %810 = vmatprep.mubr.f32.mxu0 0.0
    %811 = vmatmul.mubr.f32.gmra.mrb[0].mxu0 %v744
    %v812 = vpop.f32.mrb[0].mxu0
    %v813 = vadd.f32 0.0, %v812
    %v814 = vpop.f32.mrb[0].mxu0
    %815 = vdwg.mxu0
    %v817 = vsel %vm199, %v728, 0
    %819 = vmatprep.subr.mxu0 0.0
    %820 = vmatpush1.msra.mxu0 %v731
    %821 = vmatprep.subr.mxu0 0.0
    %822 = vmatpush1.msra.mxu0 %v732
    %823 = vmatprep.subr.mxu0 0.0
    %824 = vmatpush1.msra.mxu0 %v733
    %825 = vmatprep.subr.mxu0 0.0
    %826 = vmatpush1.msra.mxu0 %v734
    %827 = vmatprep.subr.mxu0 0.0
    %828 = vmatpush1.msra.mxu0 %v735
    %829 = vmatprep.subr.mxu0 0.0
    %830 = vmatpush1.msra.mxu0 %v736
    %831 = vmatprep.subr.mxu0 0.0
    %832 = vmatpush1.msra.mxu0 %v737
    %833 = vmatprep.subr.mxu0 0.0
    %834 = vmatpush1.msra.mxu0 %v738
    %835 = vmatprep.subr.mxu0 0.0
    %836 = vmatpush1.msra.mxu0 0.0
    %837 = vmatprep.subr.mxu0 0.0
    %838 = vmatpush1.msra.mxu0 0.0
    %839 = vmatprep.subr.mxu0 0.0
    %840 = vmatpush1.msra.mxu0 0.0
    %841 = vmatprep.subr.mxu0 0.0
    %842 = vmatpush1.msra.mxu0 0.0
    %843 = vmatprep.subr.mxu0 0.0
    %844 = vmatpush1.msra.mxu0 0.0
    %845 = vmatprep.subr.mxu0 0.0
    %846 = vmatpush1.msra.mxu0 0.0
    %847 = vmatprep.subr.mxu0 0.0
    %848 = vmatpush1.msra.mxu0 0.0
    %849 = vmatprep.subr.mxu0 0.0
    %850 = vmatpush1.msra.mxu0 0.0
    %851 = vmatprep.subr.mxu0 0.0
    %852 = vmatpush1.msra.mxu0 0.0
    %853 = vmatprep.subr.mxu0 0.0
    %854 = vmatpush1.msra.mxu0 0.0
    %855 = vmatprep.subr.mxu0 0.0
    %856 = vmatpush1.msra.mxu0 0.0
    %857 = vmatprep.subr.mxu0 0.0
    %858 = vmatpush1.msra.mxu0 0.0
    %859 = vmatprep.subr.mxu0 0.0
    %860 = vmatpush1.msra.mxu0 0.0
    %861 = vmatprep.subr.mxu0 0.0
    %862 = vmatpush1.msra.mxu0 0.0
    %863 = vmatprep.subr.mxu0 0.0
    %864 = vmatpush1.msra.mxu0 0.0
    %865 = vmatprep.subr.mxu0 0.0
    %866 = vmatpush1.msra.mxu0 0.0
    %867 = vmatprep.subr.mxu0 0.0
    %868 = vmatpush1.msra.mxu0 0.0
    %869 = vmatprep.subr.mxu0 0.0
    %870 = vmatpush1.msra.mxu0 0.0
    %871 = vmatprep.subr.mxu0 0.0
    %872 = vmatpush1.msra.mxu0 0.0
    %873 = vmatprep.subr.mxu0 0.0
    %874 = vmatpush1.msra.mxu0 0.0
    %875 = vmatprep.subr.mxu0 0.0
    %876 = vmatpush1.msra.mxu0 0.0
    %877 = vmatprep.subr.mxu0 0.0
    %878 = vmatpush1.msra.mxu0 0.0
    %879 = vmatprep.subr.mxu0 0.0
    %880 = vmatpush1.msra.mxu0 0.0
    %881 = vmatprep.subr.mxu0 0.0
    %882 = vmatpush1.msra.mxu0 0.0
    %883 = vmatprep.mubr.f32.mxu0 0.0
    %884 = vmatmul.mubr.f32.gmra.mrb[0].mxu0 %v817
    %v885 = vpop.f32.mrb[0].mxu0
    %v886 = vadd.f32 %v813, %v885
    %v887 = vpop.f32.mrb[0].mxu0
    %888 = vdwg.mxu0
    %v889 = vld [vmem:[%s12] sm:$0x1]
    %v891 = vlaneseq
    %v892 = vshrl.u32 %v891, 7
    %v893 = vsub.s32 0, %v892
    %v894 = vrot.slane %v889, %v893
    %v896 = vadd.f32 %v886, %v894
    %v897 = vrot.slane %v896, 4
    %v898 = vadd.f32 %v896, %v897
    %v899 = vrot.slane %v898, 2
    %v900 = vadd.f32 %v898, %v899
    %v901 = vrot.slane %v900, 1
    %v902 = vadd.f32 %v900, %v901
    %v903 = vrcp.pop 8.0
    %v904 = vmul.f32 %v902, %v903
    %v905 = vsub.f32 %v896, %v904
    %v906 = vmul.f32 %v905, %v905
    %v907 = vrot.slane %v906, 4
    %v908 = vadd.f32 %v906, %v907
    %v909 = vrot.slane %v908, 2
    %v910 = vadd.f32 %v908, %v909
    %v911 = vrot.slane %v910, 1
    %v912 = vadd.f32 %v910, %v911
    %v913 = vmul.f32 %v912, %v903
    %v914 = vadd.f32 %v913, 1e-05
    %v915 = vrsqrt.pop %v914
    %v916 = vmul.f32 %v905, %v915
    %v917 = vld [vmem:[%s15] sm:$0x1]
    %v919 = vlaneseq
    %v920 = vshrl.u32 %v919, 7
    %v921 = vsub.s32 0, %v920
    %v922 = vrot.slane %v917, %v921
    %v924 = vmul.f32 %v916, %v922
    %v925 = vld [vmem:[%s16] sm:$0x1]
    %v927 = vlaneseq
    %v928 = vshrl.u32 %v927, 7
    %v929 = vsub.s32 0, %v928
    %v930 = vrot.slane %v925, %v929
    %v932 = vadd.f32 %v924, %v930
    %v933 = vmul.f32 %v932, %v932
    %v934 = vmul.f32 %v932, %v933
    %v935 = vmul.f32 %v934, 0.044715
    %v936 = vadd.f32 %v932, %v935
    %v937 = vmul.f32 %v936, 0.7978846
    %v938 = vtanh.pop %v937
    %v939 = vadd.f32 %v938, 1.0
    %v940 = vmul.f32 %v939, 0.5
    %v941 = vmul.f32 %v932, %v940
    %v942 = vld [vmem:[#allocation13] sm:$0xff]
    %v943 = vld [vmem:[#allocation13 + $0x8] sm:$0xff]
    %v944 = vld [vmem:[#allocation13 + $0x10] sm:$0xff]
    %v945 = vld [vmem:[#allocation13 + $0x18] sm:$0xff]
    %v946 = vld [vmem:[#allocation13 + $0x20] sm:$0xff]
    %v947 = vld [vmem:[#allocation13 + $0x28] sm:$0xff]
    %v948 = vld [vmem:[#allocation13 + $0x30] sm:$0xff]
    %v949 = vld [vmem:[#allocation13 + $0x38] sm:$0xff]
    %v950 = vld [vmem:[#allocation13 + $0x40] sm:$0xff]
    %v951 = vld [vmem:[#allocation13 + $0x48] sm:$0xff]
    %v952 = vld [vmem:[#allocation13 + $0x50] sm:$0xff]
    %v953 = vld [vmem:[#allocation13 + $0x58] sm:$0xff]
    %v954 = vld [vmem:[#allocation13 + $0x60] sm:$0xff]
    %v955 = vld [vmem:[#allocation13 + $0x68] sm:$0xff]
    %v956 = vld [vmem:[#allocation13 + $0x70] sm:$0xff]
    %v957 = vld [vmem:[#allocation13 + $0x78] sm:$0xff]
    %v958 = vld [vmem:[%s14] sm:$0x1]
    %v960 = vlaneseq
    %v961 = vshrl.u32 %v960, 7
    %v962 = vsub.s32 0, %v961
    %v963 = vrot.slane %v958, %v962
    %965 = vmatprep.subr.mxu0 0.0
    %966 = vmatpush1.msra.mxu0 %v942
    %967 = vmatprep.subr.mxu0 0.0
    %968 = vmatpush1.msra.mxu0 %v943
    %969 = vmatprep.subr.mxu0 0.0
    %970 = vmatpush1.msra.mxu0 %v944
    %971 = vmatprep.subr.mxu0 0.0
    %972 = vmatpush1.msra.mxu0 %v945
    %973 = vmatprep.subr.mxu0 0.0
    %974 = vmatpush1.msra.mxu0 %v946
    %975 = vmatprep.subr.mxu0 0.0
    %976 = vmatpush1.msra.mxu0 %v947
    %977 = vmatprep.subr.mxu0 0.0
    %978 = vmatpush1.msra.mxu0 %v948
    %979 = vmatprep.subr.mxu0 0.0
    %980 = vmatpush1.msra.mxu0 %v949
    %981 = vmatprep.subr.mxu0 0.0
    %982 = vmatpush1.msra.mxu0 %v950
    %983 = vmatprep.subr.mxu0 0.0
    %984 = vmatpush1.msra.mxu0 %v951
    %985 = vmatprep.subr.mxu0 0.0
    %986 = vmatpush1.msra.mxu0 %v952
    %987 = vmatprep.subr.mxu0 0.0
    %988 = vmatpush1.msra.mxu0 %v953
    %989 = vmatprep.subr.mxu0 0.0
    %990 = vmatpush1.msra.mxu0 %v954
    %991 = vmatprep.subr.mxu0 0.0
    %992 = vmatpush1.msra.mxu0 %v955
    %993 = vmatprep.subr.mxu0 0.0
    %994 = vmatpush1.msra.mxu0 %v956
    %995 = vmatprep.subr.mxu0 0.0
    %996 = vmatpush1.msra.mxu0 %v957
    %997 = vmatprep.subr.mxu0 0.0
    %998 = vmatpush1.msra.mxu0 0.0
    %999 = vmatprep.subr.mxu0 0.0
    %1000 = vmatpush1.msra.mxu0 0.0
    %1001 = vmatprep.subr.mxu0 0.0
    %1002 = vmatpush1.msra.mxu0 0.0
    %1003 = vmatprep.subr.mxu0 0.0
    %1004 = vmatpush1.msra.mxu0 0.0
    %1005 = vmatprep.subr.mxu0 0.0
    %1006 = vmatpush1.msra.mxu0 0.0
    %1007 = vmatprep.subr.mxu0 0.0
    %1008 = vmatpush1.msra.mxu0 0.0
    %1009 = vmatprep.subr.mxu0 0.0
    %1010 = vmatpush1.msra.mxu0 0.0
    %1011 = vmatprep.subr.mxu0 0.0
    %1012 = vmatpush1.msra.mxu0 0.0
    %1013 = vmatprep.subr.mxu0 0.0
    %1014 = vmatpush1.msra.mxu0 0.0
    %1015 = vmatprep.subr.mxu0 0.0
    %1016 = vmatpush1.msra.mxu0 0.0
    %1017 = vmatprep.subr.mxu0 0.0
    %1018 = vmatpush1.msra.mxu0 0.0
    %1019 = vmatprep.subr.mxu0 0.0
    %1020 = vmatpush1.msra.mxu0 0.0
    %1021 = vmatprep.subr.mxu0 0.0
    %1022 = vmatpush1.msra.mxu0 0.0
    %1023 = vmatprep.subr.mxu0 0.0
    %1024 = vmatpush1.msra.mxu0 0.0
    %1025 = vmatprep.subr.mxu0 0.0
    %1026 = vmatpush1.msra.mxu0 0.0
    %1027 = vmatprep.subr.mxu0 0.0
    %1028 = vmatpush1.msra.mxu0 0.0
    %1029 = vmatprep.mubr.f32.mxu0 0.0
    %1030 = vmatmul.mubr.f32.gmra.mrb[0].mxu0 %v941
    %v1031 = vpop.f32.mrb[0].mxu0
    %v1032 = vadd.f32 %v963, %v1031
    %v1033 = vpop.f32.mrb[0].mxu0
    %1034 = vdwg.mxu0
    %v1035 = vrot.slane %v1032, 4
    %v1036 = vadd.f32 %v1032, %v1035
    %v1037 = vrot.slane %v1036, 2
    %v1038 = vadd.f32 %v1036, %v1037
    %v1039 = vrot.slane %v1038, 1
    %v1040 = vadd.f32 %v1038, %v1039
    %v1041 = vmul.f32 %v1040, %v903
    %v1042 = vsub.f32 %v1032, %v1041
    %v1043 = vmul.f32 %v1042, %v1042
    %v1044 = vrot.slane %v1043, 4
    %v1045 = vadd.f32 %v1043, %v1044
    %v1046 = vrot.slane %v1045, 2
    %v1047 = vadd.f32 %v1045, %v1046
    %v1048 = vrot.slane %v1047, 1
    %v1049 = vadd.f32 %v1047, %v1048
    %v1050 = vmul.f32 %v1049, %v903
    %v1051 = vadd.f32 %v1050, 1e-05
    %v1052 = vrsqrt.pop %v1051
    %v1053 = vmul.f32 %v1042, %v1052
    %s1054 = scalar_lea.vmem %s15, 1
    %v1055 = vld [vmem:[%s1054] sm:$0x1]
    %v1057 = vlaneseq
    %v1058 = vshrl.u32 %v1057, 7
    %v1059 = vsub.s32 0, %v1058
    %v1060 = vrot.slane %v1055, %v1059
    %v1062 = vmul.f32 %v1053, %v1060
    %s1063 = scalar_lea.vmem %s16, 1
    %v1064 = vld [vmem:[%s1063] sm:$0x1]
    %v1066 = vlaneseq
    %v1067 = vshrl.u32 %v1066, 7
    %v1068 = vsub.s32 0, %v1067
    %v1069 = vrot.slane %v1064, %v1068
    %v1071 = vadd.f32 %v1062, %v1069
    %v1072 = vmul.f32 %v1071, %v1071
    %v1073 = vmul.f32 %v1071, %v1072
    %v1074 = vmul.f32 %v1073, 0.044715
    %v1075 = vadd.f32 %v1071, %v1074
    %v1076 = vmul.f32 %v1075, 0.7978846
    %v1077 = vtanh.pop %v1076
    %v1078 = vadd.f32 %v1077, 1.0
    %v1079 = vmul.f32 %v1078, 0.5
    %v1080 = vmul.f32 %v1071, %v1079
    %s1081 = scalar_lea.vmem [#allocation13], 128
    %v1082 = vld [vmem:[%s1081] sm:$0xff]
    %v1083 = vld [vmem:[%s1081 + $0x8] sm:$0xff]
    %v1084 = vld [vmem:[%s1081 + $0x10] sm:$0xff]
    %v1085 = vld [vmem:[%s1081 + $0x18] sm:$0xff]
    %v1086 = vld [vmem:[%s1081 + $0x20] sm:$0xff]
    %v1087 = vld [vmem:[%s1081 + $0x28] sm:$0xff]
    %v1088 = vld [vmem:[%s1081 + $0x30] sm:$0xff]
    %v1089 = vld [vmem:[%s1081 + $0x38] sm:$0xff]
    %v1090 = vld [vmem:[%s1081 + $0x40] sm:$0xff]
    %v1091 = vld [vmem:[%s1081 + $0x48] sm:$0xff]
    %v1092 = vld [vmem:[%s1081 + $0x50] sm:$0xff]
    %v1093 = vld [vmem:[%s1081 + $0x58] sm:$0xff]
    %v1094 = vld [vmem:[%s1081 + $0x60] sm:$0xff]
    %v1095 = vld [vmem:[%s1081 + $0x68] sm:$0xff]
    %v1096 = vld [vmem:[%s1081 + $0x70] sm:$0xff]
    %v1097 = vld [vmem:[%s1081 + $0x78] sm:$0xff]
    %s1098 = scalar_lea.vmem %s14, 1
    %v1099 = vld [vmem:[%s1098] sm:$0x1]
    %v1101 = vlaneseq
    %v1102 = vshrl.u32 %v1101, 7
    %v1103 = vsub.s32 0, %v1102
    %v1104 = vrot.slane %v1099, %v1103
    %1106 = vmatprep.subr.mxu0 0.0
    %1107 = vmatpush1.msra.mxu0 %v1082
    %1108 = vmatprep.subr.mxu0 0.0
    %1109 = vmatpush1.msra.mxu0 %v1083
    %1110 = vmatprep.subr.mxu0 0.0
    %1111 = vmatpush1.msra.mxu0 %v1084
    %1112 = vmatprep.subr.mxu0 0.0
    %1113 = vmatpush1.msra.mxu0 %v1085
    %1114 = vmatprep.subr.mxu0 0.0
    %1115 = vmatpush1.msra.mxu0 %v1086
    %1116 = vmatprep.subr.mxu0 0.0
    %1117 = vmatpush1.msra.mxu0 %v1087
    %1118 = vmatprep.subr.mxu0 0.0
    %1119 = vmatpush1.msra.mxu0 %v1088
    %1120 = vmatprep.subr.mxu0 0.0
    %1121 = vmatpush1.msra.mxu0 %v1089
    %1122 = vmatprep.subr.mxu0 0.0
    %1123 = vmatpush1.msra.mxu0 %v1090
    %1124 = vmatprep.subr.mxu0 0.0
    %1125 = vmatpush1.msra.mxu0 %v1091
    %1126 = vmatprep.subr.mxu0 0.0
    %1127 = vmatpush1.msra.mxu0 %v1092
    %1128 = vmatprep.subr.mxu0 0.0
    %1129 = vmatpush1.msra.mxu0 %v1093
    %1130 = vmatprep.subr.mxu0 0.0
    %1131 = vmatpush1.msra.mxu0 %v1094
    %1132 = vmatprep.subr.mxu0 0.0
    %1133 = vmatpush1.msra.mxu0 %v1095
    %1134 = vmatprep.subr.mxu0 0.0
    %1135 = vmatpush1.msra.mxu0 %v1096
    %1136 = vmatprep.subr.mxu0 0.0
    %1137 = vmatpush1.msra.mxu0 %v1097
    %1138 = vmatprep.subr.mxu0 0.0
    %1139 = vmatpush1.msra.mxu0 0.0
    %1140 = vmatprep.subr.mxu0 0.0
    %1141 = vmatpush1.msra.mxu0 0.0
    %1142 = vmatprep.subr.mxu0 0.0
    %1143 = vmatpush1.msra.mxu0 0.0
    %1144 = vmatprep.subr.mxu0 0.0
    %1145 = vmatpush1.msra.mxu0 0.0
    %1146 = vmatprep.subr.mxu0 0.0
    %1147 = vmatpush1.msra.mxu0 0.0
    %1148 = vmatprep.subr.mxu0 0.0
    %1149 = vmatpush1.msra.mxu0 0.0
    %1150 = vmatprep.subr.mxu0 0.0
    %1151 = vmatpush1.msra.mxu0 0.0
    %1152 = vmatprep.subr.mxu0 0.0
    %1153 = vmatpush1.msra.mxu0 0.0
    %1154 = vmatprep.subr.mxu0 0.0
    %1155 = vmatpush1.msra.mxu0 0.0
    %1156 = vmatprep.subr.mxu0 0.0
    %1157 = vmatpush1.msra.mxu0 0.0
    %1158 = vmatprep.subr.mxu0 0.0
    %1159 = vmatpush1.msra.mxu0 0.0
    %1160 = vmatprep.subr.mxu0 0.0
    %1161 = vmatpush1.msra.mxu0 0.0
    %1162 = vmatprep.subr.mxu0 0.0
    %1163 = vmatpush1.msra.mxu0 0.0
    %1164 = vmatprep.subr.mxu0 0.0
    %1165 = vmatpush1.msra.mxu0 0.0
    %1166 = vmatprep.subr.mxu0 0.0
    %1167 = vmatpush1.msra.mxu0 0.0
    %1168 = vmatprep.subr.mxu0 0.0
    %1169 = vmatpush1.msra.mxu0 0.0
    %1170 = vmatprep.mubr.f32.mxu0 0.0
    %1171 = vmatmul.mubr.f32.gmra.mrb[0].mxu0 %v1080
    %v1172 = vpop.f32.mrb[0].mxu0
    %v1173 = vadd.f32 %v1104, %v1172
    %v1174 = vpop.f32.mrb[0].mxu0
    %1175 = vdwg.mxu0
    %v1176 = vadd.f32 %v896, %v1173
    %v1177 = vrot.slane %v1176, 4
    %v1178 = vadd.f32 %v1176, %v1177
    %v1179 = vrot.slane %v1178, 2
    %v1180 = vadd.f32 %v1178, %v1179
    %v1181 = vrot.slane %v1180, 1
    %v1182 = vadd.f32 %v1180, %v1181
    %v1183 = vmul.f32 %v1182, %v903
    %v1184 = vsub.f32 %v1176, %v1183
    %v1185 = vmul.f32 %v1184, %v1184
    %v1186 = vrot.slane %v1185, 4
    %v1187 = vadd.f32 %v1185, %v1186
    %v1188 = vrot.slane %v1187, 2
    %v1189 = vadd.f32 %v1187, %v1188
    %v1190 = vrot.slane %v1189, 1
    %v1191 = vadd.f32 %v1189, %v1190
    %v1192 = vmul.f32 %v1191, %v903
    %v1193 = vadd.f32 %v1192, 1e-05
    %v1194 = vrsqrt.pop %v1193
    %v1195 = vmul.f32 %v1184, %v1194
    %s1196 = scalar_lea.vmem %s15, 2
    %v1197 = vld [vmem:[%s1196] sm:$0x1]
    %v1199 = vlaneseq
    %v1200 = vshrl.u32 %v1199, 7
    %v1201 = vsub.s32 0, %v1200
    %v1202 = vrot.slane %v1197, %v1201
    %v1204 = vmul.f32 %v1195, %v1202
    %s1205 = scalar_lea.vmem %s16, 2
    %v1206 = vld [vmem:[%s1205] sm:$0x1]
    %v1208 = vlaneseq
    %v1209 = vshrl.u32 %v1208, 7
    %v1210 = vsub.s32 0, %v1209
    %v1211 = vrot.slane %v1206, %v1210
    %v1213 = vadd.f32 %v1204, %v1211
    %v1214 = vmul.f32 %v1213, %v1213
    %v1215 = vmul.f32 %v1213, %v1214
    %v1216 = vmul.f32 %v1215, 0.044715
    %v1217 = vadd.f32 %v1213, %v1216
    %v1218 = vmul.f32 %v1217, 0.7978846
    %v1219 = vtanh.pop %v1218
    %v1220 = vadd.f32 %v1219, 1.0
    %v1221 = vmul.f32 %v1220, 0.5
    %v1222 = vmul.f32 %v1213, %v1221
    %s1223 = scalar_lea.vmem [#allocation13], 256
    %v1224 = vld [vmem:[%s1223] sm:$0xff]
    %v1225 = vld [vmem:[%s1223 + $0x8] sm:$0xff]
    %v1226 = vld [vmem:[%s1223 + $0x10] sm:$0xff]
    %v1227 = vld [vmem:[%s1223 + $0x18] sm:$0xff]
    %v1228 = vld [vmem:[%s1223 + $0x20] sm:$0xff]
    %v1229 = vld [vmem:[%s1223 + $0x28] sm:$0xff]
    %v1230 = vld [vmem:[%s1223 + $0x30] sm:$0xff]
    %v1231 = vld [vmem:[%s1223 + $0x38] sm:$0xff]
    %v1232 = vld [vmem:[%s1223 + $0x40] sm:$0xff]
    %v1233 = vld [vmem:[%s1223 + $0x48] sm:$0xff]
    %v1234 = vld [vmem:[%s1223 + $0x50] sm:$0xff]
    %v1235 = vld [vmem:[%s1223 + $0x58] sm:$0xff]
    %v1236 = vld [vmem:[%s1223 + $0x60] sm:$0xff]
    %v1237 = vld [vmem:[%s1223 + $0x68] sm:$0xff]
    %v1238 = vld [vmem:[%s1223 + $0x70] sm:$0xff]
    %v1239 = vld [vmem:[%s1223 + $0x78] sm:$0xff]
    %s1240 = scalar_lea.vmem %s14, 2
    %v1241 = vld [vmem:[%s1240] sm:$0x1]
    %v1243 = vlaneseq
    %v1244 = vshrl.u32 %v1243, 7
    %v1245 = vsub.s32 0, %v1244
    %v1246 = vrot.slane %v1241, %v1245
    %1248 = vmatprep.subr.mxu0 0.0
    %1249 = vmatpush1.msra.mxu0 %v1224
    %1250 = vmatprep.subr.mxu0 0.0
    %1251 = vmatpush1.msra.mxu0 %v1225
    %1252 = vmatprep.subr.mxu0 0.0
    %1253 = vmatpush1.msra.mxu0 %v1226
    %1254 = vmatprep.subr.mxu0 0.0
    %1255 = vmatpush1.msra.mxu0 %v1227
    %1256 = vmatprep.subr.mxu0 0.0
    %1257 = vmatpush1.msra.mxu0 %v1228
    %1258 = vmatprep.subr.mxu0 0.0
    %1259 = vmatpush1.msra.mxu0 %v1229
    %1260 = vmatprep.subr.mxu0 0.0
    %1261 = vmatpush1.msra.mxu0 %v1230
    %1262 = vmatprep.subr.mxu0 0.0
    %1263 = vmatpush1.msra.mxu0 %v1231
    %1264 = vmatprep.subr.mxu0 0.0
    %1265 = vmatpush1.msra.mxu0 %v1232
    %1266 = vmatprep.subr.mxu0 0.0
    %1267 = vmatpush1.msra.mxu0 %v1233
    %1268 = vmatprep.subr.mxu0 0.0
    %1269 = vmatpush1.msra.mxu0 %v1234
    %1270 = vmatprep.subr.mxu0 0.0
    %1271 = vmatpush1.msra.mxu0 %v1235
    %1272 = vmatprep.subr.mxu0 0.0
    %1273 = vmatpush1.msra.mxu0 %v1236
    %1274 = vmatprep.subr.mxu0 0.0
    %1275 = vmatpush1.msra.mxu0 %v1237
    %1276 = vmatprep.subr.mxu0 0.0
    %1277 = vmatpush1.msra.mxu0 %v1238
    %1278 = vmatprep.subr.mxu0 0.0
    %1279 = vmatpush1.msra.mxu0 %v1239
    %1280 = vmatprep.subr.mxu0 0.0
    %1281 = vmatpush1.msra.mxu0 0.0
    %1282 = vmatprep.subr.mxu0 0.0
    %1283 = vmatpush1.msra.mxu0 0.0
    %1284 = vmatprep.subr.mxu0 0.0
    %1285 = vmatpush1.msra.mxu0 0.0
    %1286 = vmatprep.subr.mxu0 0.0
    %1287 = vmatpush1.msra.mxu0 0.0
    %1288 = vmatprep.subr.mxu0 0.0
    %1289 = vmatpush1.msra.mxu0 0.0
    %1290 = vmatprep.subr.mxu0 0.0
    %1291 = vmatpush1.msra.mxu0 0.0
    %1292 = vmatprep.subr.mxu0 0.0
    %1293 = vmatpush1.msra.mxu0 0.0
    %1294 = vmatprep.subr.mxu0 0.0
    %1295 = vmatpush1.msra.mxu0 0.0
    %1296 = vmatprep.subr.mxu0 0.0
    %1297 = vmatpush1.msra.mxu0 0.0
    %1298 = vmatprep.subr.mxu0 0.0
    %1299 = vmatpush1.msra.mxu0 0.0
    %1300 = vmatprep.subr.mxu0 0.0
    %1301 = vmatpush1.msra.mxu0 0.0
    %1302 = vmatprep.subr.mxu0 0.0
    %1303 = vmatpush1.msra.mxu0 0.0
    %1304 = vmatprep.subr.mxu0 0.0
    %1305 = vmatpush1.msra.mxu0 0.0
    %1306 = vmatprep.subr.mxu0 0.0
    %1307 = vmatpush1.msra.mxu0 0.0
    %1308 = vmatprep.subr.mxu0 0.0
    %1309 = vmatpush1.msra.mxu0 0.0
    %1310 = vmatprep.subr.mxu0 0.0
    %1311 = vmatpush1.msra.mxu0 0.0
    %1312 = vmatprep.mubr.f32.mxu0 0.0
    %1313 = vmatmul.mubr.f32.gmra.mrb[0].mxu0 %v1222
    %v1314 = vpop.f32.mrb[0].mxu0
    %v1315 = vadd.f32 %v1246, %v1314
    %v1316 = vpop.f32.mrb[0].mxu0
    %1317 = vdwg.mxu0
    %v1318 = vrot.slane %v1315, 4
    %v1319 = vadd.f32 %v1315, %v1318
    %v1320 = vrot.slane %v1319, 2
    %v1321 = vadd.f32 %v1319, %v1320
    %v1322 = vrot.slane %v1321, 1
    %v1323 = vadd.f32 %v1321, %v1322
    %v1324 = vmul.f32 %v1323, %v903
    %v1325 = vsub.f32 %v1315, %v1324
    %v1326 = vmul.f32 %v1325, %v1325
    %v1327 = vrot.slane %v1326, 4
    %v1328 = vadd.f32 %v1326, %v1327
    %v1329 = vrot.slane %v1328, 2
    %v1330 = vadd.f32 %v1328, %v1329
    %v1331 = vrot.slane %v1330, 1
    %v1332 = vadd.f32 %v1330, %v1331
    %v1333 = vmul.f32 %v1332, %v903
    %v1334 = vadd.f32 %v1333, 1e-05
    %v1335 = vrsqrt.pop %v1334
    %v1336 = vmul.f32 %v1325, %v1335
    %s1337 = scalar_lea.vmem %s15, 3
    %v1338 = vld [vmem:[%s1337] sm:$0x1]
    %v1340 = vlaneseq
    %v1341 = vshrl.u32 %v1340, 7
    %v1342 = vsub.s32 0, %v1341
    %v1343 = vrot.slane %v1338, %v1342
    %v1345 = vmul.f32 %v1336, %v1343
    %s1346 = scalar_lea.vmem %s16, 3
    %v1347 = vld [vmem:[%s1346] sm:$0x1]
    %v1349 = vlaneseq
    %v1350 = vshrl.u32 %v1349, 7
    %v1351 = vsub.s32 0, %v1350
    %v1352 = vrot.slane %v1347, %v1351
    %v1354 = vadd.f32 %v1345, %v1352
    %v1355 = vmul.f32 %v1354, %v1354
    %v1356 = vmul.f32 %v1354, %v1355
    %v1357 = vmul.f32 %v1356, 0.044715
    %v1358 = vadd.f32 %v1354, %v1357
    %v1359 = vmul.f32 %v1358, 0.7978846
    %v1360 = vtanh.pop %v1359
    %v1361 = vadd.f32 %v1360, 1.0
    %v1362 = vmul.f32 %v1361, 0.5
    %v1363 = vmul.f32 %v1354, %v1362
    %s1364 = scalar_lea.vmem [#allocation13], 384
    %v1365 = vld [vmem:[%s1364] sm:$0xff]
    %v1366 = vld [vmem:[%s1364 + $0x8] sm:$0xff]
    %v1367 = vld [vmem:[%s1364 + $0x10] sm:$0xff]
    %v1368 = vld [vmem:[%s1364 + $0x18] sm:$0xff]
    %v1369 = vld [vmem:[%s1364 + $0x20] sm:$0xff]
    %v1370 = vld [vmem:[%s1364 + $0x28] sm:$0xff]
    %v1371 = vld [vmem:[%s1364 + $0x30] sm:$0xff]
    %v1372 = vld [vmem:[%s1364 + $0x38] sm:$0xff]
    %v1373 = vld [vmem:[%s1364 + $0x40] sm:$0xff]
    %v1374 = vld [vmem:[%s1364 + $0x48] sm:$0xff]
    %v1375 = vld [vmem:[%s1364 + $0x50] sm:$0xff]
    %v1376 = vld [vmem:[%s1364 + $0x58] sm:$0xff]
    %v1377 = vld [vmem:[%s1364 + $0x60] sm:$0xff]
    %v1378 = vld [vmem:[%s1364 + $0x68] sm:$0xff]
    %v1379 = vld [vmem:[%s1364 + $0x70] sm:$0xff]
    %v1380 = vld [vmem:[%s1364 + $0x78] sm:$0xff]
    %s1381 = scalar_lea.vmem %s14, 3
    %v1382 = vld [vmem:[%s1381] sm:$0x1]
    %v1384 = vlaneseq
    %v1385 = vshrl.u32 %v1384, 7
    %v1386 = vsub.s32 0, %v1385
    %v1387 = vrot.slane %v1382, %v1386
    %1389 = vmatprep.subr.mxu0 0.0
    %1390 = vmatpush1.msra.mxu0 %v1365
    %1391 = vmatprep.subr.mxu0 0.0
    %1392 = vmatpush1.msra.mxu0 %v1366
    %1393 = vmatprep.subr.mxu0 0.0
    %1394 = vmatpush1.msra.mxu0 %v1367
    %1395 = vmatprep.subr.mxu0 0.0
    %1396 = vmatpush1.msra.mxu0 %v1368
    %1397 = vmatprep.subr.mxu0 0.0
    %1398 = vmatpush1.msra.mxu0 %v1369
    %1399 = vmatprep.subr.mxu0 0.0
    %1400 = vmatpush1.msra.mxu0 %v1370
    %1401 = vmatprep.subr.mxu0 0.0
    %1402 = vmatpush1.msra.mxu0 %v1371
    %1403 = vmatprep.subr.mxu0 0.0
    %1404 = vmatpush1.msra.mxu0 %v1372
    %1405 = vmatprep.subr.mxu0 0.0
    %1406 = vmatpush1.msra.mxu0 %v1373
    %1407 = vmatprep.subr.mxu0 0.0
    %1408 = vmatpush1.msra.mxu0 %v1374
    %1409 = vmatprep.subr.mxu0 0.0
    %1410 = vmatpush1.msra.mxu0 %v1375
    %1411 = vmatprep.subr.mxu0 0.0
    %1412 = vmatpush1.msra.mxu0 %v1376
    %1413 = vmatprep.subr.mxu0 0.0
    %1414 = vmatpush1.msra.mxu0 %v1377
    %1415 = vmatprep.subr.mxu0 0.0
    %1416 = vmatpush1.msra.mxu0 %v1378
    %1417 = vmatprep.subr.mxu0 0.0
    %1418 = vmatpush1.msra.mxu0 %v1379
    %1419 = vmatprep.subr.mxu0 0.0
    %1420 = vmatpush1.msra.mxu0 %v1380
    %1421 = vmatprep.subr.mxu0 0.0
    %1422 = vmatpush1.msra.mxu0 0.0
    %1423 = vmatprep.subr.mxu0 0.0
    %1424 = vmatpush1.msra.mxu0 0.0
    %1425 = vmatprep.subr.mxu0 0.0
    %1426 = vmatpush1.msra.mxu0 0.0
    %1427 = vmatprep.subr.mxu0 0.0
    %1428 = vmatpush1.msra.mxu0 0.0
    %1429 = vmatprep.subr.mxu0 0.0
    %1430 = vmatpush1.msra.mxu0 0.0
    %1431 = vmatprep.subr.mxu0 0.0
    %1432 = vmatpush1.msra.mxu0 0.0
    %1433 = vmatprep.subr.mxu0 0.0
    %1434 = vmatpush1.msra.mxu0 0.0
    %1435 = vmatprep.subr.mxu0 0.0
    %1436 = vmatpush1.msra.mxu0 0.0
    %1437 = vmatprep.subr.mxu0 0.0
    %1438 = vmatpush1.msra.mxu0 0.0
    %1439 = vmatprep.subr.mxu0 0.0
    %1440 = vmatpush1.msra.mxu0 0.0
    %1441 = vmatprep.subr.mxu0 0.0
    %1442 = vmatpush1.msra.mxu0 0.0
    %1443 = vmatprep.subr.mxu0 0.0
    %1444 = vmatpush1.msra.mxu0 0.0
    %1445 = vmatprep.subr.mxu0 0.0
    %1446 = vmatpush1.msra.mxu0 0.0
    %1447 = vmatprep.subr.mxu0 0.0
    %1448 = vmatpush1.msra.mxu0 0.0
    %1449 = vmatprep.subr.mxu0 0.0
    %1450 = vmatpush1.msra.mxu0 0.0
    %1451 = vmatprep.subr.mxu0 0.0
    %1452 = vmatpush1.msra.mxu0 0.0
    %1453 = vmatprep.mubr.f32.mxu0 0.0
    %1454 = vmatmul.mubr.f32.gmra.mrb[0].mxu0 %v1363
    %v1455 = vpop.f32.mrb[0].mxu0
    %v1456 = vadd.f32 %v1387, %v1455
    %v1457 = vpop.f32.mrb[0].mxu0
    %1458 = vdwg.mxu0
    %v1459 = vadd.f32 %v1176, %v1456
    %v1460 = vld [vmem:[#allocation14] sm:$0xff]
    %v1461 = vld [vmem:[#allocation14 + $0x8] sm:$0xff]
    %v1462 = vld [vmem:[#allocation14 + $0x10] sm:$0xff]
    %v1463 = vld [vmem:[#allocation14 + $0x18] sm:$0xff]
    %v1464 = vld [vmem:[#allocation14 + $0x20] sm:$0xff]
    %v1465 = vld [vmem:[#allocation14 + $0x28] sm:$0xff]
    %v1466 = vld [vmem:[#allocation14 + $0x30] sm:$0xff]
    %v1467 = vld [vmem:[#allocation14 + $0x38] sm:$0xff]
    %v1468 = vld [vmem:[#allocation14 + $0x40] sm:$0xff]
    %v1469 = vld [vmem:[#allocation14 + $0x48] sm:$0xff]
    %v1470 = vld [vmem:[#allocation14 + $0x50] sm:$0xff]
    %v1471 = vld [vmem:[#allocation14 + $0x58] sm:$0xff]
    %v1472 = vld [vmem:[#allocation14 + $0x60] sm:$0xff]
    %v1473 = vld [vmem:[#allocation14 + $0x68] sm:$0xff]
    %v1474 = vld [vmem:[#allocation14 + $0x70] sm:$0xff]
    %v1475 = vld [vmem:[#allocation14 + $0x78] sm:$0xff]
    %v1476 = vld [vmem:[%s18] sm:$0x1]
    %v1478 = vlaneseq
    %v1479 = vshrl.u32 %v1478, 7
    %v1480 = vsub.s32 0, %v1479
    %v1481 = vrot.slane %v1476, %v1480
    %1483 = vmatprep.subr.mxu0 0.0
    %1484 = vmatpush1.msra.mxu0 %v1460
    %1485 = vmatprep.subr.mxu0 0.0
    %1486 = vmatpush1.msra.mxu0 %v1461
    %1487 = vmatprep.subr.mxu0 0.0
    %1488 = vmatpush1.msra.mxu0 %v1462
    %1489 = vmatprep.subr.mxu0 0.0
    %1490 = vmatpush1.msra.mxu0 %v1463
    %1491 = vmatprep.subr.mxu0 0.0
    %1492 = vmatpush1.msra.mxu0 %v1464
    %1493 = vmatprep.subr.mxu0 0.0
    %1494 = vmatpush1.msra.mxu0 %v1465
    %1495 = vmatprep.subr.mxu0 0.0
    %1496 = vmatpush1.msra.mxu0 %v1466
    %1497 = vmatprep.subr.mxu0 0.0
    %1498 = vmatpush1.msra.mxu0 %v1467
    %1499 = vmatprep.subr.mxu0 0.0
    %1500 = vmatpush1.msra.mxu0 %v1468
    %1501 = vmatprep.subr.mxu0 0.0
    %1502 = vmatpush1.msra.mxu0 %v1469
    %1503 = vmatprep.subr.mxu0 0.0
    %1504 = vmatpush1.msra.mxu0 %v1470
    %1505 = vmatprep.subr.mxu0 0.0
    %1506 = vmatpush1.msra.mxu0 %v1471
    %1507 = vmatprep.subr.mxu0 0.0
    %1508 = vmatpush1.msra.mxu0 %v1472
    %1509 = vmatprep.subr.mxu0 0.0
    %1510 = vmatpush1.msra.mxu0 %v1473
    %1511 = vmatprep.subr.mxu0 0.0
    %1512 = vmatpush1.msra.mxu0 %v1474
    %1513 = vmatprep.subr.mxu0 0.0
    %1514 = vmatpush1.msra.mxu0 %v1475
    %1515 = vmatprep.subr.mxu0 0.0
    %1516 = vmatpush1.msra.mxu0 0.0
    %1517 = vmatprep.subr.mxu0 0.0
    %1518 = vmatpush1.msra.mxu0 0.0
    %1519 = vmatprep.subr.mxu0 0.0
    %1520 = vmatpush1.msra.mxu0 0.0
    %1521 = vmatprep.subr.mxu0 0.0
    %1522 = vmatpush1.msra.mxu0 0.0
    %1523 = vmatprep.subr.mxu0 0.0
    %1524 = vmatpush1.msra.mxu0 0.0
    %1525 = vmatprep.subr.mxu0 0.0
    %1526 = vmatpush1.msra.mxu0 0.0
    %1527 = vmatprep.subr.mxu0 0.0
    %1528 = vmatpush1.msra.mxu0 0.0
    %1529 = vmatprep.subr.mxu0 0.0
    %1530 = vmatpush1.msra.mxu0 0.0
    %1531 = vmatprep.subr.mxu0 0.0
    %1532 = vmatpush1.msra.mxu0 0.0
    %1533 = vmatprep.subr.mxu0 0.0
    %1534 = vmatpush1.msra.mxu0 0.0
    %1535 = vmatprep.subr.mxu0 0.0
    %1536 = vmatpush1.msra.mxu0 0.0
    %1537 = vmatprep.subr.mxu0 0.0
    %1538 = vmatpush1.msra.mxu0 0.0
    %1539 = vmatprep.subr.mxu0 0.0
    %1540 = vmatpush1.msra.mxu0 0.0
    %1541 = vmatprep.subr.mxu0 0.0
    %1542 = vmatpush1.msra.mxu0 0.0
    %1543 = vmatprep.subr.mxu0 0.0
    %1544 = vmatpush1.msra.mxu0 0.0
    %1545 = vmatprep.subr.mxu0 0.0
    %1546 = vmatpush1.msra.mxu0 0.0
    %1547 = vmatprep.mubr.f32.mxu0 0.0
    %1548 = vmatmul.mubr.f32.gmra.mrb[0].mxu0 %v1459
    %v1549 = vpop.f32.mrb[0].mxu0
    %v1550 = vadd.f32 %v1481, %v1549
    %v1551 = vpop.f32.mrb[0].mxu0
    %1552 = vdwg.mxu0
    %vm1553 = vcmask 64512
    %1554 = vst.msk [vmem:[#allocation16] sm:$0xff] %vm1553, %v1550
    // Predicated region
    $region110: #{network_with_priors_forward.1} parent=1 // pred_check
      _
    $region111: #{network_with_priors_forward.1} parent=1 // pred_check_branch
      %1556 = sbr.rel (0) target = $region113
    $region112: #{network_with_priors_forward.1} parent=1 // pred_region
      %s1558 = ssub.s32 128, 128
      %1559 = vsyncadd [#allocation4], %s1558
      %s1561 = sshll.u32 [#allocation16], 4
      %s1562 = int_to_ptr.vmem [resolvable:$true] %s1561
      %1564 = dma.vmem_to_hbm [thread:$0]  %s1562, 128, %s19, [#allocation4]
    $region113: #{network_with_priors_forward.1} parent=1 // pred_fallthru
      _
    // Predicated region
    $region114: #{network_with_priors_forward.1} parent=1 // pred_check
      _
    $region115: #{network_with_priors_forward.1} parent=1 // pred_check_branch
      %1566 = sbr.rel (0) target = $region117
    $region116: #{network_with_priors_forward.1} parent=1 // pred_region
      %1567 = dma.done [#allocation4], 128
    $region117: #{network_with_priors_forward.1} parent=1 // pred_fallthru
      _
    %1568 = vsyncpa [#allocation3], 1
    %1569 = vsyncpa [#allocation6], 1
    %1570 = vsyncpa [#allocation9], 1
    %1571 = vsyncpa [#allocation12], 1
    %1572 = vsyncpa [#allocation15], 1
    %1573 = vsyncpa [#allocation4], 1

</llo_original>
